<compile_context>
chip_gen: v5e
topology: v5e:2x2
jax: 0.10.0
libtpu: 0.0.40
codegen_flags: <defaults>
</compile_context>

<pallas_src>
import functools

import jax
import jax.numpy as jnp
from jax.experimental import pallas as pl
from jax.experimental.pallas import tpu as pltpu


# ---------------------------------------------------------------------------
# Fused Pallas kernel: one (branch, batch) element per grid step
# ---------------------------------------------------------------------------
def _fused_branch_kernel(xy_ref, mask_ref, w0_ref, p0_ref, wlu_ref, plu_ref,
                         atop_ref, o_ref, *, depth, H, W, cout):
    """Whole bottom_block branch for one image.

    xy_ref   : (Cin, HW)            input image, channels on sublanes
    mask_ref : (9, HW)              zero-padding validity mask per 3x3 tap
    w0_ref   : (9*Cout, Cin)        stem conv weight, tap k rows [k*Cout,(k+1)*Cout)
    p0_ref   : (Cout, 2)            stem folded BN [scale, shift]
    wlu_ref  : (depth*9*Cout, Cout) LUconv weights, layer-major
    plu_ref  : (depth*Cout, 3)      LUconv folded BN + PReLU [scale, shift, alpha]
    atop_ref : (Cout, 1)            top-level PReLU slope
    o_ref    : (Cout, HW)           branch output (lane-dense)
    """
    HW = H * W
    masks = mask_ref[...]                                   # (9, HW)

    def conv3x3(act, w_ref, row0):
        # act: (Cin_l, HW).  out(co,p) = sum_k sum_ci W_k[co,ci] * act[ci, p+off_k]
        # with zero padding handled by per-tap masks on the lane-rolled view.
        acc = jnp.zeros((cout, HW), jnp.float32)
        for k in range(9):
            dh, dw = k // 3 - 1, k % 3 - 1
            off = dh * W + dw
            shifted = act if off == 0 else pltpu.roll(act, (-off) % HW, 1)
            tap = shifted * masks[k:k + 1, :]               # mask == zero padding
            wk = w_ref[row0 + k * cout: row0 + (k + 1) * cout, :]
            acc = acc + jnp.dot(wk, tap, preferred_element_type=jnp.float32)
        return acc

    # --- stem: Conv3x3 -> BatchNorm (folded) -> ReLU ---
    # TODO(synk): Dropout2d is eval-mode identity; training-mode channel
    #             dropout has no deterministic equivalent here.
    x = xy_ref[...]                                         # (Cin, HW)
    p0 = p0_ref[...]                                        # (Cout, 2)
    y = conv3x3(x, w0_ref, 0) * p0[:, 0:1] + p0[:, 1:2]
    y = jnp.maximum(y, 0.0)                                 # residual source

    # --- depth x LUconv: PReLU(BN(Conv(h))) ---
    h = y
    for d in range(depth):
        pd = plu_ref[d * cout:(d + 1) * cout, :]            # (Cout, 3)
        z = conv3x3(h, wlu_ref, d * 9 * cout) * pd[:, 0:1] + pd[:, 1:2]
        h = jnp.where(z > 0, z, pd[:, 2:3] * z)

    # --- fused residual add + top PReLU epilogue ---
    s = h + y
    a = atop_ref[...]                                       # (Cout, 1)
    o_ref[...] = jnp.where(s > 0, s, a * s).astype(o_ref.dtype)


# ---------------------------------------------------------------------------
# Parameter packing helpers (plain JAX, tiny)
# ---------------------------------------------------------------------------
def _weight_rows(w_oihw):
    """(Cout, Cin, 3, 3) -> (9*Cout, Cin); tap k=kh*3+kw at rows [k*Cout,(k+1)*Cout)."""
    cout = w_oihw.shape[0]
    return jnp.transpose(w_oihw, (2, 3, 0, 1)).reshape(9 * cout, w_oihw.shape[1])


def _fold_bn(bias, gamma, beta, mean, var, eps=1e-5):
    """Fold conv bias + eval-mode BatchNorm into per-channel scale/shift (1-D)."""
    scale = gamma / jnp.sqrt(var + eps)
    shift = (bias - mean) * scale + beta
    return scale, shift


def _boundary_masks(H, W):
    """(9, H*W) validity masks implementing zero padding for each 3x3 tap."""
    h = jnp.arange(H * W, dtype=jnp.int32) // W
    w = jnp.arange(H * W, dtype=jnp.int32) % W
    rows = []
    for dh in (-1, 0, 1):
        for dw in (-1, 0, 1):
            ok = (h + dh >= 0) & (h + dh < H) & (w + dw >= 0) & (w + dw < W)
            rows.append(ok.astype(jnp.float32))
    return jnp.stack(rows, axis=0)


# ---------------------------------------------------------------------------
# Forward pass
# ---------------------------------------------------------------------------
def bottom_block_forward(params, x_nchw, y_nchw, depth):
    N, Cin, H, W = x_nchw.shape
    Cout = params["conv0_w"].shape[0]
    HW = H * W

    # NCHW already orders channels-then-spatial: pure reshape -> (N, C, HW).
    xy = jnp.concatenate(
        [x_nchw.reshape(N, Cin, HW), y_nchw.reshape(N, Cin, HW)], axis=0)

    masks = _boundary_masks(H, W)                            # (9, HW)

    w0 = _weight_rows(params["conv0_w"]).astype(jnp.float32)  # (9*Cout, Cin)
    s0, sh0 = _fold_bn(params["conv0_b"], params["bn0_gamma"], params["bn0_beta"],
                       params["bn0_mean"], params["bn0_var"])
    p0 = jnp.stack([s0, sh0], axis=1).astype(jnp.float32)      # (Cout, 2)

    if depth > 0:
        wlu = jnp.concatenate(
            [_weight_rows(params[f"lu{d}_conv_w"]) for d in range(depth)],
            axis=0).astype(jnp.float32)                        # (depth*9*Cout, Cout)
        plu_rows = []
        for d in range(depth):
            sc, sh = _fold_bn(params[f"lu{d}_conv_b"], params[f"lu{d}_bn_gamma"],
                              params[f"lu{d}_bn_beta"], params[f"lu{d}_bn_mean"],
                              params[f"lu{d}_bn_var"])
            plu_rows.append(jnp.stack([sc, sh, params[f"lu{d}_alpha"]], axis=1))
        plu = jnp.concatenate(plu_rows, axis=0).astype(jnp.float32)  # (depth*Cout, 3)
    else:  # dummies (never read when depth == 0)
        wlu = jnp.zeros((9 * Cout, Cout), jnp.float32)
        plu = jnp.zeros((Cout, 3), jnp.float32)

    alpha_top = params["relu_alpha"].reshape(Cout, 1).astype(jnp.float32)

    kernel = functools.partial(_fused_branch_kernel,
                               depth=depth, H=H, W=W, cout=Cout)
    res = pl.pallas_call(
        kernel,
        out_shape=jax.ShapeDtypeStruct((2 * N, Cout, HW), jnp.float32),
        grid=(2 * N,),
        in_specs=[
            pl.BlockSpec((None, Cin, HW), lambda g: (g, 0, 0)),
            pl.BlockSpec(masks.shape, lambda g: (0, 0)),
            pl.BlockSpec(w0.shape, lambda g: (0, 0)),
            pl.BlockSpec(p0.shape, lambda g: (0, 0)),
            pl.BlockSpec(wlu.shape, lambda g: (0, 0)),
            pl.BlockSpec(plu.shape, lambda g: (0, 0)),
            pl.BlockSpec(alpha_top.shape, lambda g: (0, 0)),
        ],
        out_specs=pl.BlockSpec((None, Cout, HW), lambda g: (g, 0, 0)),
        compiler_params=pltpu.CompilerParams(dimension_semantics=("parallel",)),
    )(xy, masks, w0, p0, wlu, plu, alpha_top)                  # (2N, Cout, HW)

    out1, out2 = res[:N], res[N:]
    # TODO(synk): the channel concat stays in XLA; writing straight into the
    #             (2*Cout+Cin)-channel output would need unaligned sublane
    #             out-blocks and only saves one ~40 KB copy at these sizes.
    out = jnp.concatenate([out1, x_nchw.reshape(N, Cin, HW), out2], axis=1)
    return out.reshape(N, 2 * Cout + Cin, H, W)


# ---------------------------------------------------------------------------
# Pure-JAX reference (for numerical verification)
# ---------------------------------------------------------------------------
def _ref_conv_bn(x, w, b, gamma, beta, mean, var, eps=1e-5):
    y = jax.lax.conv_general_dilated(
        x, w, (1, 1), ((1, 1), (1, 1)),
        dimension_numbers=("NCHW", "OIHW", "NCHW"),
        precision=jax.lax.Precision.HIGHEST)
    y = y + b[None, :, None, None]
    y = (y - mean[None, :, None, None]) / jnp.sqrt(var[None, :, None, None] + eps)
    return y * gamma[None, :, None, None] + beta[None, :, None, None]


def _ref_prelu(x, alpha):
    return jnp.where(x > 0, x, alpha[None, :, None, None] * x)


def bottom_block_ref(params, x, y, depth):
    def stem(a):
        h = _ref_conv_bn(a, params["conv0_w"], params["conv0_b"], params["bn0_gamma"],
                         params["bn0_beta"], params["bn0_mean"], params["bn0_var"])
        return jnp.maximum(h, 0.0)

    def seq(a):
        h = a
        for d in range(depth):
            h = _ref_conv_bn(h, params[f"lu{d}_conv_w"], params[f"lu{d}_conv_b"],
                             params[f"lu{d}_bn_gamma"], params[f"lu{d}_bn_beta"],
                             params[f"lu{d}_bn_mean"], params[f"lu{d}_bn_var"])
            h = _ref_prelu(h, params[f"lu{d}_alpha"])
        return h

    out_x, out_y = stem(x), stem(y)
    out1 = _ref_prelu(seq(out_x) + out_x, params["relu_alpha"])
    out2 = _ref_prelu(seq(out_y) + out_y, params["relu_alpha"])
    return jnp.concatenate([out1, x, out2], axis=1)


# ---------------------------------------------------------------------------
# main
# ---------------------------------------------------------------------------
if __name__ == "__main__":
    N, Cin, H, W = 2, 4, 16, 16
    Cout, depth = 8, 2

    key = jax.random.PRNGKey(0)
    keys = iter(jax.random.split(key, 32))

    def nrm(shape, s=0.1):
        return (s * jax.random.normal(next(keys), shape)).astype(jnp.float32)

    def uni(shape, lo, hi):
        return jax.random.uniform(next(keys), shape, jnp.float32, lo, hi)

    params = {
        "conv0_w": nrm((Cout, Cin, 3, 3)),
        "conv0_b": nrm((Cout,)),
        "bn0_gamma": uni((Cout,), 0.5, 1.5),
        "bn0_beta": nrm((Cout,)),
        "bn0_mean": nrm((Cout,)),
        "bn0_var": uni((Cout,), 0.5, 1.5),
        "relu_alpha": uni((Cout,), 0.1, 0.4),   # PReLU slope (relu=False path)
    }
    for d in range(depth):
        params[f"lu{d}_conv_w"] = nrm((Cout, Cout, 3, 3))
        params[f"lu{d}_conv_b"] = nrm((Cout,))
        params[f"lu{d}_bn_gamma"] = uni((Cout,), 0.5, 1.5)
        params[f"lu{d}_bn_beta"] = nrm((Cout,))
        params[f"lu{d}_bn_mean"] = nrm((Cout,))
        params[f"lu{d}_bn_var"] = uni((Cout,), 0.5, 1.5)
        params[f"lu{d}_alpha"] = uni((Cout,), 0.1, 0.4)

    x = jax.random.normal(next(keys), (N, Cin, H, W), jnp.float32)
    y = jax.random.normal(next(keys), (N, Cin, H, W), jnp.float32)

    out = bottom_block_forward(params, x, y, depth)
    out = jax.block_until_ready(out)

    assert out.shape == (N, 2 * Cout + Cin, H, W), out.shape

    ref = bottom_block_ref(params, x, y, depth)
    assert jnp.allclose(out, ref, rtol=2e-2, atol=2e-2), float(jnp.max(jnp.abs(out - ref)))

    print("KERNEL_OK")
</pallas_src>

<mosaic_0001>
module attributes {stable_mosaic.version = 11 : i64} {
  func.func @_fused_branch_kernel(%arg0: i32, %arg1: memref<1x4x256xf32, #tpu.memory_space<vmem>>, %arg2: memref<9x256xf32, #tpu.memory_space<vmem>>, %arg3: memref<72x4xf32, #tpu.memory_space<vmem>>, %arg4: memref<8x2xf32, #tpu.memory_space<vmem>>, %arg5: memref<144x8xf32, #tpu.memory_space<vmem>>, %arg6: memref<16x3xf32, #tpu.memory_space<vmem>>, %arg7: memref<8x1xf32, #tpu.memory_space<vmem>>, %arg8: memref<1x8x256xf32, #tpu.memory_space<vmem>>) attributes {dimension_semantics = [#tpu.dimension_semantics<parallel>], iteration_bounds = array<i64: 4>, scalar_prefetch = 0 : i64, scratch_operands = 0 : i64, tpu.core_type = #tpu.core_type<tc>, window_params = [{transform_indices = @transform_0, window_bounds = array<i64: 1, 4, 256>}, {pipeline_mode = #tpu.pipeline_mode<synchronous>, transform_indices = @transform_1, window_bounds = array<i64: 9, 256>}, {pipeline_mode = #tpu.pipeline_mode<synchronous>, transform_indices = @transform_2, window_bounds = array<i64: 72, 4>}, {pipeline_mode = #tpu.pipeline_mode<synchronous>, transform_indices = @transform_3, window_bounds = array<i64: 8, 2>}, {pipeline_mode = #tpu.pipeline_mode<synchronous>, transform_indices = @transform_4, window_bounds = array<i64: 144, 8>}, {pipeline_mode = #tpu.pipeline_mode<synchronous>, transform_indices = @transform_5, window_bounds = array<i64: 16, 3>}, {pipeline_mode = #tpu.pipeline_mode<synchronous>, transform_indices = @transform_6, window_bounds = array<i64: 8, 1>}, {transform_indices = @transform_7, window_bounds = array<i64: 1, 8, 256>}]} {
    %c0 = arith.constant 0 : index
    %c0_0 = arith.constant 0 : index
    %0 = vector.load %arg2[%c0, %c0_0] : memref<9x256xf32, #tpu.memory_space<vmem>>, vector<9x256xf32>
    %c0_1 = arith.constant 0 : index
    %c0_2 = arith.constant 0 : index
    %c0_3 = arith.constant 0 : index
    %1 = vector.load %arg1[%c0_1, %c0_2, %c0_3] : memref<1x4x256xf32, #tpu.memory_space<vmem>>, vector<1x4x256xf32>
    %2 = vector.shape_cast %1 : vector<1x4x256xf32> to vector<4x256xf32>
    %c0_4 = arith.constant 0 : index
    %c0_5 = arith.constant 0 : index
    %3 = vector.load %arg4[%c0_4, %c0_5] : memref<8x2xf32, #tpu.memory_space<vmem>>, vector<8x2xf32>
    %cst = arith.constant 0.000000e+00 : f32
    %4 = vector.broadcast %cst : f32 to vector<8x256xf32>
    %c17_i32 = arith.constant 17 : i32
    %5 = tpu.dynamic_rotate %2 by %c17_i32 dim 1 : vector<4x256xf32>, i32 -> vector<4x256xf32>
    %6 = vector.extract_strided_slice %0 {offsets = [0, 0], sizes = [1, 256], strides = [1, 1]} : vector<9x256xf32> to vector<1x256xf32>
    %7 = vector.broadcast %6 : vector<1x256xf32> to vector<4x256xf32>
    %8 = arith.mulf %5, %7 : vector<4x256xf32>
    %c0_6 = arith.constant 0 : index
    %c0_7 = arith.constant 0 : index
    %9 = vector.load %arg3[%c0_6, %c0_7] : memref<72x4xf32, #tpu.memory_space<vmem>>, vector<8x4xf32>
    %cst_8 = arith.constant dense<0.000000e+00> : vector<8x256xf32>
    %10 = tpu.matmul %9, %8, %cst_8 {dimension_numbers = #tpu.dot_dimension_numbers<[1], [0], [0], [1], [0, 0, 1, 1], [], []>} : vector<8x4xf32>, vector<4x256xf32>, vector<8x256xf32> -> vector<8x256xf32>
    %11 = arith.addf %4, %10 : vector<8x256xf32>
    %c16_i32 = arith.constant 16 : i32
    %12 = tpu.dynamic_rotate %2 by %c16_i32 dim 1 : vector<4x256xf32>, i32 -> vector<4x256xf32>
    %13 = vector.extract_strided_slice %0 {offsets = [1, 0], sizes = [1, 256], strides = [1, 1]} : vector<9x256xf32> to vector<1x256xf32>
    %14 = vector.broadcast %13 : vector<1x256xf32> to vector<4x256xf32>
    %15 = arith.mulf %12, %14 : vector<4x256xf32>
    %c8 = arith.constant 8 : index
    %c0_9 = arith.constant 0 : index
    %16 = vector.load %arg3[%c8, %c0_9] : memref<72x4xf32, #tpu.memory_space<vmem>>, vector<8x4xf32>
    %cst_10 = arith.constant dense<0.000000e+00> : vector<8x256xf32>
    %17 = tpu.matmul %16, %15, %cst_10 {dimension_numbers = #tpu.dot_dimension_numbers<[1], [0], [0], [1], [0, 0, 1, 1], [], []>} : vector<8x4xf32>, vector<4x256xf32>, vector<8x256xf32> -> vector<8x256xf32>
    %18 = arith.addf %11, %17 : vector<8x256xf32>
    %c15_i32 = arith.constant 15 : i32
    %19 = tpu.dynamic_rotate %2 by %c15_i32 dim 1 : vector<4x256xf32>, i32 -> vector<4x256xf32>
    %20 = vector.extract_strided_slice %0 {offsets = [2, 0], sizes = [1, 256], strides = [1, 1]} : vector<9x256xf32> to vector<1x256xf32>
    %21 = vector.broadcast %20 : vector<1x256xf32> to vector<4x256xf32>
    %22 = arith.mulf %19, %21 : vector<4x256xf32>
    %c16 = arith.constant 16 : index
    %c0_11 = arith.constant 0 : index
    %23 = vector.load %arg3[%c16, %c0_11] : memref<72x4xf32, #tpu.memory_space<vmem>>, vector<8x4xf32>
    %cst_12 = arith.constant dense<0.000000e+00> : vector<8x256xf32>
    %24 = tpu.matmul %23, %22, %cst_12 {dimension_numbers = #tpu.dot_dimension_numbers<[1], [0], [0], [1], [0, 0, 1, 1], [], []>} : vector<8x4xf32>, vector<4x256xf32>, vector<8x256xf32> -> vector<8x256xf32>
    %25 = arith.addf %18, %24 : vector<8x256xf32>
    %c1_i32 = arith.constant 1 : i32
    %26 = tpu.dynamic_rotate %2 by %c1_i32 dim 1 : vector<4x256xf32>, i32 -> vector<4x256xf32>
    %27 = vector.extract_strided_slice %0 {offsets = [3, 0], sizes = [1, 256], strides = [1, 1]} : vector<9x256xf32> to vector<1x256xf32>
    %28 = vector.broadcast %27 : vector<1x256xf32> to vector<4x256xf32>
    %29 = arith.mulf %26, %28 : vector<4x256xf32>
    %c24 = arith.constant 24 : index
    %c0_13 = arith.constant 0 : index
    %30 = vector.load %arg3[%c24, %c0_13] : memref<72x4xf32, #tpu.memory_space<vmem>>, vector<8x4xf32>
    %cst_14 = arith.constant dense<0.000000e+00> : vector<8x256xf32>
    %31 = tpu.matmul %30, %29, %cst_14 {dimension_numbers = #tpu.dot_dimension_numbers<[1], [0], [0], [1], [0, 0, 1, 1], [], []>} : vector<8x4xf32>, vector<4x256xf32>, vector<8x256xf32> -> vector<8x256xf32>
    %32 = arith.addf %25, %31 : vector<8x256xf32>
    %33 = vector.extract_strided_slice %0 {offsets = [4, 0], sizes = [1, 256], strides = [1, 1]} : vector<9x256xf32> to vector<1x256xf32>
    %34 = vector.broadcast %33 : vector<1x256xf32> to vector<4x256xf32>
    %35 = arith.mulf %2, %34 : vector<4x256xf32>
    %c32 = arith.constant 32 : index
    %c0_15 = arith.constant 0 : index
    %36 = vector.load %arg3[%c32, %c0_15] : memref<72x4xf32, #tpu.memory_space<vmem>>, vector<8x4xf32>
    %cst_16 = arith.constant dense<0.000000e+00> : vector<8x256xf32>
    %37 = tpu.matmul %36, %35, %cst_16 {dimension_numbers = #tpu.dot_dimension_numbers<[1], [0], [0], [1], [0, 0, 1, 1], [], []>} : vector<8x4xf32>, vector<4x256xf32>, vector<8x256xf32> -> vector<8x256xf32>
    %38 = arith.addf %32, %37 : vector<8x256xf32>
    %c255_i32 = arith.constant 255 : i32
    %39 = tpu.dynamic_rotate %2 by %c255_i32 dim 1 : vector<4x256xf32>, i32 -> vector<4x256xf32>
    %40 = vector.extract_strided_slice %0 {offsets = [5, 0], sizes = [1, 256], strides = [1, 1]} : vector<9x256xf32> to vector<1x256xf32>
    %41 = vector.broadcast %40 : vector<1x256xf32> to vector<4x256xf32>
    %42 = arith.mulf %39, %41 : vector<4x256xf32>
    %c40 = arith.constant 40 : index
    %c0_17 = arith.constant 0 : index
    %43 = vector.load %arg3[%c40, %c0_17] : memref<72x4xf32, #tpu.memory_space<vmem>>, vector<8x4xf32>
    %cst_18 = arith.constant dense<0.000000e+00> : vector<8x256xf32>
    %44 = tpu.matmul %43, %42, %cst_18 {dimension_numbers = #tpu.dot_dimension_numbers<[1], [0], [0], [1], [0, 0, 1, 1], [], []>} : vector<8x4xf32>, vector<4x256xf32>, vector<8x256xf32> -> vector<8x256xf32>
    %45 = arith.addf %38, %44 : vector<8x256xf32>
    %c241_i32 = arith.constant 241 : i32
    %46 = tpu.dynamic_rotate %2 by %c241_i32 dim 1 : vector<4x256xf32>, i32 -> vector<4x256xf32>
    %47 = vector.extract_strided_slice %0 {offsets = [6, 0], sizes = [1, 256], strides = [1, 1]} : vector<9x256xf32> to vector<1x256xf32>
    %48 = vector.broadcast %47 : vector<1x256xf32> to vector<4x256xf32>
    %49 = arith.mulf %46, %48 : vector<4x256xf32>
    %c48 = arith.constant 48 : index
    %c0_19 = arith.constant 0 : index
    %50 = vector.load %arg3[%c48, %c0_19] : memref<72x4xf32, #tpu.memory_space<vmem>>, vector<8x4xf32>
    %cst_20 = arith.constant dense<0.000000e+00> : vector<8x256xf32>
    %51 = tpu.matmul %50, %49, %cst_20 {dimension_numbers = #tpu.dot_dimension_numbers<[1], [0], [0], [1], [0, 0, 1, 1], [], []>} : vector<8x4xf32>, vector<4x256xf32>, vector<8x256xf32> -> vector<8x256xf32>
    %52 = arith.addf %45, %51 : vector<8x256xf32>
    %c240_i32 = arith.constant 240 : i32
    %53 = tpu.dynamic_rotate %2 by %c240_i32 dim 1 : vector<4x256xf32>, i32 -> vector<4x256xf32>
    %54 = vector.extract_strided_slice %0 {offsets = [7, 0], sizes = [1, 256], strides = [1, 1]} : vector<9x256xf32> to vector<1x256xf32>
    %55 = vector.broadcast %54 : vector<1x256xf32> to vector<4x256xf32>
    %56 = arith.mulf %53, %55 : vector<4x256xf32>
    %c56 = arith.constant 56 : index
    %c0_21 = arith.constant 0 : index
    %57 = vector.load %arg3[%c56, %c0_21] : memref<72x4xf32, #tpu.memory_space<vmem>>, vector<8x4xf32>
    %cst_22 = arith.constant dense<0.000000e+00> : vector<8x256xf32>
    %58 = tpu.matmul %57, %56, %cst_22 {dimension_numbers = #tpu.dot_dimension_numbers<[1], [0], [0], [1], [0, 0, 1, 1], [], []>} : vector<8x4xf32>, vector<4x256xf32>, vector<8x256xf32> -> vector<8x256xf32>
    %59 = arith.addf %52, %58 : vector<8x256xf32>
    %c239_i32 = arith.constant 239 : i32
    %60 = tpu.dynamic_rotate %2 by %c239_i32 dim 1 : vector<4x256xf32>, i32 -> vector<4x256xf32>
    %61 = vector.extract_strided_slice %0 {offsets = [8, 0], sizes = [1, 256], strides = [1, 1]} : vector<9x256xf32> to vector<1x256xf32>
    %62 = vector.broadcast %61 : vector<1x256xf32> to vector<4x256xf32>
    %63 = arith.mulf %60, %62 : vector<4x256xf32>
    %c64 = arith.constant 64 : index
    %c0_23 = arith.constant 0 : index
    %64 = vector.load %arg3[%c64, %c0_23] : memref<72x4xf32, #tpu.memory_space<vmem>>, vector<8x4xf32>
    %cst_24 = arith.constant dense<0.000000e+00> : vector<8x256xf32>
    %65 = tpu.matmul %64, %63, %cst_24 {dimension_numbers = #tpu.dot_dimension_numbers<[1], [0], [0], [1], [0, 0, 1, 1], [], []>} : vector<8x4xf32>, vector<4x256xf32>, vector<8x256xf32> -> vector<8x256xf32>
    %66 = arith.addf %59, %65 : vector<8x256xf32>
    %67 = vector.extract_strided_slice %3 {offsets = [0, 0], sizes = [8, 1], strides = [1, 1]} : vector<8x2xf32> to vector<8x1xf32>
    %68 = vector.broadcast %67 : vector<8x1xf32> to vector<8x256xf32>
    %69 = arith.mulf %66, %68 : vector<8x256xf32>
    %70 = vector.extract_strided_slice %3 {offsets = [0, 1], sizes = [8, 1], strides = [1, 1]} : vector<8x2xf32> to vector<8x1xf32>
    %71 = vector.broadcast %70 : vector<8x1xf32> to vector<8x256xf32>
    %72 = arith.addf %69, %71 : vector<8x256xf32>
    %cst_25 = arith.constant 0.000000e+00 : f32
    %73 = vector.broadcast %cst_25 : f32 to vector<8x256xf32>
    %74 = arith.maximumf %72, %73 : vector<8x256xf32>
    %c0_26 = arith.constant 0 : index
    %c0_27 = arith.constant 0 : index
    %75 = vector.load %arg6[%c0_26, %c0_27] : memref<16x3xf32, #tpu.memory_space<vmem>>, vector<8x3xf32>
    %cst_28 = arith.constant 0.000000e+00 : f32
    %76 = vector.broadcast %cst_28 : f32 to vector<8x256xf32>
    %c17_i32_29 = arith.constant 17 : i32
    %77 = tpu.dynamic_rotate %74 by %c17_i32_29 dim 1 : vector<8x256xf32>, i32 -> vector<8x256xf32>
    %78 = vector.extract_strided_slice %0 {offsets = [0, 0], sizes = [1, 256], strides = [1, 1]} : vector<9x256xf32> to vector<1x256xf32>
    %79 = vector.broadcast %78 : vector<1x256xf32> to vector<8x256xf32>
    %80 = arith.mulf %77, %79 : vector<8x256xf32>
    %c0_30 = arith.constant 0 : index
    %c0_31 = arith.constant 0 : index
    %81 = vector.load %arg5[%c0_30, %c0_31] : memref<144x8xf32, #tpu.memory_space<vmem>>, vector<8x8xf32>
    %cst_32 = arith.constant dense<0.000000e+00> : vector<8x256xf32>
    %82 = tpu.matmul %81, %80, %cst_32 {dimension_numbers = #tpu.dot_dimension_numbers<[1], [0], [0], [1], [0, 0, 1, 1], [], []>} : vector<8x8xf32>, vector<8x256xf32>, vector<8x256xf32> -> vector<8x256xf32>
    %83 = arith.addf %76, %82 : vector<8x256xf32>
    %c16_i32_33 = arith.constant 16 : i32
    %84 = tpu.dynamic_rotate %74 by %c16_i32_33 dim 1 : vector<8x256xf32>, i32 -> vector<8x256xf32>
    %85 = vector.extract_strided_slice %0 {offsets = [1, 0], sizes = [1, 256], strides = [1, 1]} : vector<9x256xf32> to vector<1x256xf32>
    %86 = vector.broadcast %85 : vector<1x256xf32> to vector<8x256xf32>
    %87 = arith.mulf %84, %86 : vector<8x256xf32>
    %c8_34 = arith.constant 8 : index
    %c0_35 = arith.constant 0 : index
    %88 = vector.load %arg5[%c8_34, %c0_35] : memref<144x8xf32, #tpu.memory_space<vmem>>, vector<8x8xf32>
    %cst_36 = arith.constant dense<0.000000e+00> : vector<8x256xf32>
    %89 = tpu.matmul %88, %87, %cst_36 {dimension_numbers = #tpu.dot_dimension_numbers<[1], [0], [0], [1], [0, 0, 1, 1], [], []>} : vector<8x8xf32>, vector<8x256xf32>, vector<8x256xf32> -> vector<8x256xf32>
    %90 = arith.addf %83, %89 : vector<8x256xf32>
    %c15_i32_37 = arith.constant 15 : i32
    %91 = tpu.dynamic_rotate %74 by %c15_i32_37 dim 1 : vector<8x256xf32>, i32 -> vector<8x256xf32>
    %92 = vector.extract_strided_slice %0 {offsets = [2, 0], sizes = [1, 256], strides = [1, 1]} : vector<9x256xf32> to vector<1x256xf32>
    %93 = vector.broadcast %92 : vector<1x256xf32> to vector<8x256xf32>
    %94 = arith.mulf %91, %93 : vector<8x256xf32>
    %c16_38 = arith.constant 16 : index
    %c0_39 = arith.constant 0 : index
    %95 = vector.load %arg5[%c16_38, %c0_39] : memref<144x8xf32, #tpu.memory_space<vmem>>, vector<8x8xf32>
    %cst_40 = arith.constant dense<0.000000e+00> : vector<8x256xf32>
    %96 = tpu.matmul %95, %94, %cst_40 {dimension_numbers = #tpu.dot_dimension_numbers<[1], [0], [0], [1], [0, 0, 1, 1], [], []>} : vector<8x8xf32>, vector<8x256xf32>, vector<8x256xf32> -> vector<8x256xf32>
    %97 = arith.addf %90, %96 : vector<8x256xf32>
    %c1_i32_41 = arith.constant 1 : i32
    %98 = tpu.dynamic_rotate %74 by %c1_i32_41 dim 1 : vector<8x256xf32>, i32 -> vector<8x256xf32>
    %99 = vector.extract_strided_slice %0 {offsets = [3, 0], sizes = [1, 256], strides = [1, 1]} : vector<9x256xf32> to vector<1x256xf32>
    %100 = vector.broadcast %99 : vector<1x256xf32> to vector<8x256xf32>
    %101 = arith.mulf %98, %100 : vector<8x256xf32>
    %c24_42 = arith.constant 24 : index
    %c0_43 = arith.constant 0 : index
    %102 = vector.load %arg5[%c24_42, %c0_43] : memref<144x8xf32, #tpu.memory_space<vmem>>, vector<8x8xf32>
    %cst_44 = arith.constant dense<0.000000e+00> : vector<8x256xf32>
    %103 = tpu.matmul %102, %101, %cst_44 {dimension_numbers = #tpu.dot_dimension_numbers<[1], [0], [0], [1], [0, 0, 1, 1], [], []>} : vector<8x8xf32>, vector<8x256xf32>, vector<8x256xf32> -> vector<8x256xf32>
    %104 = arith.addf %97, %103 : vector<8x256xf32>
    %105 = vector.extract_strided_slice %0 {offsets = [4, 0], sizes = [1, 256], strides = [1, 1]} : vector<9x256xf32> to vector<1x256xf32>
    %106 = vector.broadcast %105 : vector<1x256xf32> to vector<8x256xf32>
    %107 = arith.mulf %74, %106 : vector<8x256xf32>
    %c32_45 = arith.constant 32 : index
    %c0_46 = arith.constant 0 : index
    %108 = vector.load %arg5[%c32_45, %c0_46] : memref<144x8xf32, #tpu.memory_space<vmem>>, vector<8x8xf32>
    %cst_47 = arith.constant dense<0.000000e+00> : vector<8x256xf32>
    %109 = tpu.matmul %108, %107, %cst_47 {dimension_numbers = #tpu.dot_dimension_numbers<[1], [0], [0], [1], [0, 0, 1, 1], [], []>} : vector<8x8xf32>, vector<8x256xf32>, vector<8x256xf32> -> vector<8x256xf32>
    %110 = arith.addf %104, %109 : vector<8x256xf32>
    %c255_i32_48 = arith.constant 255 : i32
    %111 = tpu.dynamic_rotate %74 by %c255_i32_48 dim 1 : vector<8x256xf32>, i32 -> vector<8x256xf32>
    %112 = vector.extract_strided_slice %0 {offsets = [5, 0], sizes = [1, 256], strides = [1, 1]} : vector<9x256xf32> to vector<1x256xf32>
    %113 = vector.broadcast %112 : vector<1x256xf32> to vector<8x256xf32>
    %114 = arith.mulf %111, %113 : vector<8x256xf32>
    %c40_49 = arith.constant 40 : index
    %c0_50 = arith.constant 0 : index
    %115 = vector.load %arg5[%c40_49, %c0_50] : memref<144x8xf32, #tpu.memory_space<vmem>>, vector<8x8xf32>
    %cst_51 = arith.constant dense<0.000000e+00> : vector<8x256xf32>
    %116 = tpu.matmul %115, %114, %cst_51 {dimension_numbers = #tpu.dot_dimension_numbers<[1], [0], [0], [1], [0, 0, 1, 1], [], []>} : vector<8x8xf32>, vector<8x256xf32>, vector<8x256xf32> -> vector<8x256xf32>
    %117 = arith.addf %110, %116 : vector<8x256xf32>
    %c241_i32_52 = arith.constant 241 : i32
    %118 = tpu.dynamic_rotate %74 by %c241_i32_52 dim 1 : vector<8x256xf32>, i32 -> vector<8x256xf32>
    %119 = vector.extract_strided_slice %0 {offsets = [6, 0], sizes = [1, 256], strides = [1, 1]} : vector<9x256xf32> to vector<1x256xf32>
    %120 = vector.broadcast %119 : vector<1x256xf32> to vector<8x256xf32>
    %121 = arith.mulf %118, %120 : vector<8x256xf32>
    %c48_53 = arith.constant 48 : index
    %c0_54 = arith.constant 0 : index
    %122 = vector.load %arg5[%c48_53, %c0_54] : memref<144x8xf32, #tpu.memory_space<vmem>>, vector<8x8xf32>
    %cst_55 = arith.constant dense<0.000000e+00> : vector<8x256xf32>
    %123 = tpu.matmul %122, %121, %cst_55 {dimension_numbers = #tpu.dot_dimension_numbers<[1], [0], [0], [1], [0, 0, 1, 1], [], []>} : vector<8x8xf32>, vector<8x256xf32>, vector<8x256xf32> -> vector<8x256xf32>
    %124 = arith.addf %117, %123 : vector<8x256xf32>
    %c240_i32_56 = arith.constant 240 : i32
    %125 = tpu.dynamic_rotate %74 by %c240_i32_56 dim 1 : vector<8x256xf32>, i32 -> vector<8x256xf32>
    %126 = vector.extract_strided_slice %0 {offsets = [7, 0], sizes = [1, 256], strides = [1, 1]} : vector<9x256xf32> to vector<1x256xf32>
    %127 = vector.broadcast %126 : vector<1x256xf32> to vector<8x256xf32>
    %128 = arith.mulf %125, %127 : vector<8x256xf32>
    %c56_57 = arith.constant 56 : index
    %c0_58 = arith.constant 0 : index
    %129 = vector.load %arg5[%c56_57, %c0_58] : memref<144x8xf32, #tpu.memory_space<vmem>>, vector<8x8xf32>
    %cst_59 = arith.constant dense<0.000000e+00> : vector<8x256xf32>
    %130 = tpu.matmul %129, %128, %cst_59 {dimension_numbers = #tpu.dot_dimension_numbers<[1], [0], [0], [1], [0, 0, 1, 1], [], []>} : vector<8x8xf32>, vector<8x256xf32>, vector<8x256xf32> -> vector<8x256xf32>
    %131 = arith.addf %124, %130 : vector<8x256xf32>
    %c239_i32_60 = arith.constant 239 : i32
    %132 = tpu.dynamic_rotate %74 by %c239_i32_60 dim 1 : vector<8x256xf32>, i32 -> vector<8x256xf32>
    %133 = vector.extract_strided_slice %0 {offsets = [8, 0], sizes = [1, 256], strides = [1, 1]} : vector<9x256xf32> to vector<1x256xf32>
    %134 = vector.broadcast %133 : vector<1x256xf32> to vector<8x256xf32>
    %135 = arith.mulf %132, %134 : vector<8x256xf32>
    %c64_61 = arith.constant 64 : index
    %c0_62 = arith.constant 0 : index
    %136 = vector.load %arg5[%c64_61, %c0_62] : memref<144x8xf32, #tpu.memory_space<vmem>>, vector<8x8xf32>
    %cst_63 = arith.constant dense<0.000000e+00> : vector<8x256xf32>
    %137 = tpu.matmul %136, %135, %cst_63 {dimension_numbers = #tpu.dot_dimension_numbers<[1], [0], [0], [1], [0, 0, 1, 1], [], []>} : vector<8x8xf32>, vector<8x256xf32>, vector<8x256xf32> -> vector<8x256xf32>
    %138 = arith.addf %131, %137 : vector<8x256xf32>
    %139 = vector.extract_strided_slice %75 {offsets = [0, 0], sizes = [8, 1], strides = [1, 1]} : vector<8x3xf32> to vector<8x1xf32>
    %140 = vector.broadcast %139 : vector<8x1xf32> to vector<8x256xf32>
    %141 = arith.mulf %138, %140 : vector<8x256xf32>
    %142 = vector.extract_strided_slice %75 {offsets = [0, 1], sizes = [8, 1], strides = [1, 1]} : vector<8x3xf32> to vector<8x1xf32>
    %143 = vector.broadcast %142 : vector<8x1xf32> to vector<8x256xf32>
    %144 = arith.addf %141, %143 : vector<8x256xf32>
    %cst_64 = arith.constant 0.000000e+00 : f32
    %145 = vector.broadcast %cst_64 : f32 to vector<8x256xf32>
    %146 = arith.cmpf ogt, %144, %145 : vector<8x256xf32>
    %147 = vector.extract_strided_slice %75 {offsets = [0, 2], sizes = [8, 1], strides = [1, 1]} : vector<8x3xf32> to vector<8x1xf32>
    %148 = vector.broadcast %147 : vector<8x1xf32> to vector<8x256xf32>
    %149 = arith.mulf %148, %144 : vector<8x256xf32>
    %150 = arith.select %146, %144, %149 : vector<8x256xi1>, vector<8x256xf32>
    %c8_65 = arith.constant 8 : index
    %c0_66 = arith.constant 0 : index
    %151 = vector.load %arg6[%c8_65, %c0_66] : memref<16x3xf32, #tpu.memory_space<vmem>>, vector<8x3xf32>
    %cst_67 = arith.constant 0.000000e+00 : f32
    %152 = vector.broadcast %cst_67 : f32 to vector<8x256xf32>
    %c17_i32_68 = arith.constant 17 : i32
    %153 = tpu.dynamic_rotate %150 by %c17_i32_68 dim 1 : vector<8x256xf32>, i32 -> vector<8x256xf32>
    %154 = vector.extract_strided_slice %0 {offsets = [0, 0], sizes = [1, 256], strides = [1, 1]} : vector<9x256xf32> to vector<1x256xf32>
    %155 = vector.broadcast %154 : vector<1x256xf32> to vector<8x256xf32>
    %156 = arith.mulf %153, %155 : vector<8x256xf32>
    %c72 = arith.constant 72 : index
    %c0_69 = arith.constant 0 : index
    %157 = vector.load %arg5[%c72, %c0_69] : memref<144x8xf32, #tpu.memory_space<vmem>>, vector<8x8xf32>
    %cst_70 = arith.constant dense<0.000000e+00> : vector<8x256xf32>
    %158 = tpu.matmul %157, %156, %cst_70 {dimension_numbers = #tpu.dot_dimension_numbers<[1], [0], [0], [1], [0, 0, 1, 1], [], []>} : vector<8x8xf32>, vector<8x256xf32>, vector<8x256xf32> -> vector<8x256xf32>
    %159 = arith.addf %152, %158 : vector<8x256xf32>
    %c16_i32_71 = arith.constant 16 : i32
    %160 = tpu.dynamic_rotate %150 by %c16_i32_71 dim 1 : vector<8x256xf32>, i32 -> vector<8x256xf32>
    %161 = vector.extract_strided_slice %0 {offsets = [1, 0], sizes = [1, 256], strides = [1, 1]} : vector<9x256xf32> to vector<1x256xf32>
    %162 = vector.broadcast %161 : vector<1x256xf32> to vector<8x256xf32>
    %163 = arith.mulf %160, %162 : vector<8x256xf32>
    %c80 = arith.constant 80 : index
    %c0_72 = arith.constant 0 : index
    %164 = vector.load %arg5[%c80, %c0_72] : memref<144x8xf32, #tpu.memory_space<vmem>>, vector<8x8xf32>
    %cst_73 = arith.constant dense<0.000000e+00> : vector<8x256xf32>
    %165 = tpu.matmul %164, %163, %cst_73 {dimension_numbers = #tpu.dot_dimension_numbers<[1], [0], [0], [1], [0, 0, 1, 1], [], []>} : vector<8x8xf32>, vector<8x256xf32>, vector<8x256xf32> -> vector<8x256xf32>
    %166 = arith.addf %159, %165 : vector<8x256xf32>
    %c15_i32_74 = arith.constant 15 : i32
    %167 = tpu.dynamic_rotate %150 by %c15_i32_74 dim 1 : vector<8x256xf32>, i32 -> vector<8x256xf32>
    %168 = vector.extract_strided_slice %0 {offsets = [2, 0], sizes = [1, 256], strides = [1, 1]} : vector<9x256xf32> to vector<1x256xf32>
    %169 = vector.broadcast %168 : vector<1x256xf32> to vector<8x256xf32>
    %170 = arith.mulf %167, %169 : vector<8x256xf32>
    %c88 = arith.constant 88 : index
    %c0_75 = arith.constant 0 : index
    %171 = vector.load %arg5[%c88, %c0_75] : memref<144x8xf32, #tpu.memory_space<vmem>>, vector<8x8xf32>
    %cst_76 = arith.constant dense<0.000000e+00> : vector<8x256xf32>
    %172 = tpu.matmul %171, %170, %cst_76 {dimension_numbers = #tpu.dot_dimension_numbers<[1], [0], [0], [1], [0, 0, 1, 1], [], []>} : vector<8x8xf32>, vector<8x256xf32>, vector<8x256xf32> -> vector<8x256xf32>
    %173 = arith.addf %166, %172 : vector<8x256xf32>
    %c1_i32_77 = arith.constant 1 : i32
    %174 = tpu.dynamic_rotate %150 by %c1_i32_77 dim 1 : vector<8x256xf32>, i32 -> vector<8x256xf32>
    %175 = vector.extract_strided_slice %0 {offsets = [3, 0], sizes = [1, 256], strides = [1, 1]} : vector<9x256xf32> to vector<1x256xf32>
    %176 = vector.broadcast %175 : vector<1x256xf32> to vector<8x256xf32>
    %177 = arith.mulf %174, %176 : vector<8x256xf32>
    %c96 = arith.constant 96 : index
    %c0_78 = arith.constant 0 : index
    %178 = vector.load %arg5[%c96, %c0_78] : memref<144x8xf32, #tpu.memory_space<vmem>>, vector<8x8xf32>
    %cst_79 = arith.constant dense<0.000000e+00> : vector<8x256xf32>
    %179 = tpu.matmul %178, %177, %cst_79 {dimension_numbers = #tpu.dot_dimension_numbers<[1], [0], [0], [1], [0, 0, 1, 1], [], []>} : vector<8x8xf32>, vector<8x256xf32>, vector<8x256xf32> -> vector<8x256xf32>
    %180 = arith.addf %173, %179 : vector<8x256xf32>
    %181 = vector.extract_strided_slice %0 {offsets = [4, 0], sizes = [1, 256], strides = [1, 1]} : vector<9x256xf32> to vector<1x256xf32>
    %182 = vector.broadcast %181 : vector<1x256xf32> to vector<8x256xf32>
    %183 = arith.mulf %150, %182 : vector<8x256xf32>
    %c104 = arith.constant 104 : index
    %c0_80 = arith.constant 0 : index
    %184 = vector.load %arg5[%c104, %c0_80] : memref<144x8xf32, #tpu.memory_space<vmem>>, vector<8x8xf32>
    %cst_81 = arith.constant dense<0.000000e+00> : vector<8x256xf32>
    %185 = tpu.matmul %184, %183, %cst_81 {dimension_numbers = #tpu.dot_dimension_numbers<[1], [0], [0], [1], [0, 0, 1, 1], [], []>} : vector<8x8xf32>, vector<8x256xf32>, vector<8x256xf32> -> vector<8x256xf32>
    %186 = arith.addf %180, %185 : vector<8x256xf32>
    %c255_i32_82 = arith.constant 255 : i32
    %187 = tpu.dynamic_rotate %150 by %c255_i32_82 dim 1 : vector<8x256xf32>, i32 -> vector<8x256xf32>
    %188 = vector.extract_strided_slice %0 {offsets = [5, 0], sizes = [1, 256], strides = [1, 1]} : vector<9x256xf32> to vector<1x256xf32>
    %189 = vector.broadcast %188 : vector<1x256xf32> to vector<8x256xf32>
    %190 = arith.mulf %187, %189 : vector<8x256xf32>
    %c112 = arith.constant 112 : index
    %c0_83 = arith.constant 0 : index
    %191 = vector.load %arg5[%c112, %c0_83] : memref<144x8xf32, #tpu.memory_space<vmem>>, vector<8x8xf32>
    %cst_84 = arith.constant dense<0.000000e+00> : vector<8x256xf32>
    %192 = tpu.matmul %191, %190, %cst_84 {dimension_numbers = #tpu.dot_dimension_numbers<[1], [0], [0], [1], [0, 0, 1, 1], [], []>} : vector<8x8xf32>, vector<8x256xf32>, vector<8x256xf32> -> vector<8x256xf32>
    %193 = arith.addf %186, %192 : vector<8x256xf32>
    %c241_i32_85 = arith.constant 241 : i32
    %194 = tpu.dynamic_rotate %150 by %c241_i32_85 dim 1 : vector<8x256xf32>, i32 -> vector<8x256xf32>
    %195 = vector.extract_strided_slice %0 {offsets = [6, 0], sizes = [1, 256], strides = [1, 1]} : vector<9x256xf32> to vector<1x256xf32>
    %196 = vector.broadcast %195 : vector<1x256xf32> to vector<8x256xf32>
    %197 = arith.mulf %194, %196 : vector<8x256xf32>
    %c120 = arith.constant 120 : index
    %c0_86 = arith.constant 0 : index
    %198 = vector.load %arg5[%c120, %c0_86] : memref<144x8xf32, #tpu.memory_space<vmem>>, vector<8x8xf32>
    %cst_87 = arith.constant dense<0.000000e+00> : vector<8x256xf32>
    %199 = tpu.matmul %198, %197, %cst_87 {dimension_numbers = #tpu.dot_dimension_numbers<[1], [0], [0], [1], [0, 0, 1, 1], [], []>} : vector<8x8xf32>, vector<8x256xf32>, vector<8x256xf32> -> vector<8x256xf32>
    %200 = arith.addf %193, %199 : vector<8x256xf32>
    %c240_i32_88 = arith.constant 240 : i32
    %201 = tpu.dynamic_rotate %150 by %c240_i32_88 dim 1 : vector<8x256xf32>, i32 -> vector<8x256xf32>
    %202 = vector.extract_strided_slice %0 {offsets = [7, 0], sizes = [1, 256], strides = [1, 1]} : vector<9x256xf32> to vector<1x256xf32>
    %203 = vector.broadcast %202 : vector<1x256xf32> to vector<8x256xf32>
    %204 = arith.mulf %201, %203 : vector<8x256xf32>
    %c128 = arith.constant 128 : index
    %c0_89 = arith.constant 0 : index
    %205 = vector.load %arg5[%c128, %c0_89] : memref<144x8xf32, #tpu.memory_space<vmem>>, vector<8x8xf32>
    %cst_90 = arith.constant dense<0.000000e+00> : vector<8x256xf32>
    %206 = tpu.matmul %205, %204, %cst_90 {dimension_numbers = #tpu.dot_dimension_numbers<[1], [0], [0], [1], [0, 0, 1, 1], [], []>} : vector<8x8xf32>, vector<8x256xf32>, vector<8x256xf32> -> vector<8x256xf32>
    %207 = arith.addf %200, %206 : vector<8x256xf32>
    %c239_i32_91 = arith.constant 239 : i32
    %208 = tpu.dynamic_rotate %150 by %c239_i32_91 dim 1 : vector<8x256xf32>, i32 -> vector<8x256xf32>
    %209 = vector.extract_strided_slice %0 {offsets = [8, 0], sizes = [1, 256], strides = [1, 1]} : vector<9x256xf32> to vector<1x256xf32>
    %210 = vector.broadcast %209 : vector<1x256xf32> to vector<8x256xf32>
    %211 = arith.mulf %208, %210 : vector<8x256xf32>
    %c136 = arith.constant 136 : index
    %c0_92 = arith.constant 0 : index
    %212 = vector.load %arg5[%c136, %c0_92] : memref<144x8xf32, #tpu.memory_space<vmem>>, vector<8x8xf32>
    %cst_93 = arith.constant dense<0.000000e+00> : vector<8x256xf32>
    %213 = tpu.matmul %212, %211, %cst_93 {dimension_numbers = #tpu.dot_dimension_numbers<[1], [0], [0], [1], [0, 0, 1, 1], [], []>} : vector<8x8xf32>, vector<8x256xf32>, vector<8x256xf32> -> vector<8x256xf32>
    %214 = arith.addf %207, %213 : vector<8x256xf32>
    %215 = vector.extract_strided_slice %151 {offsets = [0, 0], sizes = [8, 1], strides = [1, 1]} : vector<8x3xf32> to vector<8x1xf32>
    %216 = vector.broadcast %215 : vector<8x1xf32> to vector<8x256xf32>
    %217 = arith.mulf %214, %216 : vector<8x256xf32>
    %218 = vector.extract_strided_slice %151 {offsets = [0, 1], sizes = [8, 1], strides = [1, 1]} : vector<8x3xf32> to vector<8x1xf32>
    %219 = vector.broadcast %218 : vector<8x1xf32> to vector<8x256xf32>
    %220 = arith.addf %217, %219 : vector<8x256xf32>
    %cst_94 = arith.constant 0.000000e+00 : f32
    %221 = vector.broadcast %cst_94 : f32 to vector<8x256xf32>
    %222 = arith.cmpf ogt, %220, %221 : vector<8x256xf32>
    %223 = vector.extract_strided_slice %151 {offsets = [0, 2], sizes = [8, 1], strides = [1, 1]} : vector<8x3xf32> to vector<8x1xf32>
    %224 = vector.broadcast %223 : vector<8x1xf32> to vector<8x256xf32>
    %225 = arith.mulf %224, %220 : vector<8x256xf32>
    %226 = arith.select %222, %220, %225 : vector<8x256xi1>, vector<8x256xf32>
    %227 = arith.addf %226, %74 : vector<8x256xf32>
    %c0_95 = arith.constant 0 : index
    %c0_96 = arith.constant 0 : index
    %228 = vector.load %arg7[%c0_95, %c0_96] : memref<8x1xf32, #tpu.memory_space<vmem>>, vector<8x1xf32>
    %cst_97 = arith.constant 0.000000e+00 : f32
    %229 = vector.broadcast %cst_97 : f32 to vector<8x256xf32>
    %230 = arith.cmpf ogt, %227, %229 : vector<8x256xf32>
    %231 = vector.broadcast %228 : vector<8x1xf32> to vector<8x256xf32>
    %232 = arith.mulf %231, %227 : vector<8x256xf32>
    %233 = arith.select %230, %227, %232 : vector<8x256xi1>, vector<8x256xf32>
    %c0_98 = arith.constant 0 : index
    %c0_99 = arith.constant 0 : index
    %c0_100 = arith.constant 0 : index
    %234 = vector.load %arg8[%c0_98, %c0_99, %c0_100] : memref<1x8x256xf32, #tpu.memory_space<vmem>>, vector<1x8x256xf32>
    %235 = vector.shape_cast %234 : vector<1x8x256xf32> to vector<8x256xf32>
    %236 = vector.shape_cast %233 : vector<8x256xf32> to vector<1x8x256xf32>
    tpu.vector_store %arg8[%c0_98, %c0_99, %c0_100], %236 {strides = array<i32>} : memref<1x8x256xf32, #tpu.memory_space<vmem>>, vector<1x8x256xf32>,
    return
  }
  func.func @transform_0(%arg0: i32) -> (i32, i32, i32) {
    %c0_i32 = arith.constant 0 : i32
    %c0_i32_0 = arith.constant 0 : i32
    %c0_i32_1 = arith.constant 0 : i32
    return %arg0, %c0_i32, %c0_i32_0 : i32, i32, i32
  }
  func.func @transform_1(%arg0: i32) -> (i32, i32) {
    %c0_i32 = arith.constant 0 : i32
    %c0_i32_0 = arith.constant 0 : i32
    %c0_i32_1 = arith.constant 0 : i32
    return %c0_i32, %c0_i32_0 : i32, i32
  }
  func.func @transform_2(%arg0: i32) -> (i32, i32) {
    %c0_i32 = arith.constant 0 : i32
    %c0_i32_0 = arith.constant 0 : i32
    %c0_i32_1 = arith.constant 0 : i32
    return %c0_i32, %c0_i32_0 : i32, i32
  }
  func.func @transform_3(%arg0: i32) -> (i32, i32) {
    %c0_i32 = arith.constant 0 : i32
    %c0_i32_0 = arith.constant 0 : i32
    %c0_i32_1 = arith.constant 0 : i32
    return %c0_i32, %c0_i32_0 : i32, i32
  }
  func.func @transform_4(%arg0: i32) -> (i32, i32) {
    %c0_i32 = arith.constant 0 : i32
    %c0_i32_0 = arith.constant 0 : i32
    %c0_i32_1 = arith.constant 0 : i32
    return %c0_i32, %c0_i32_0 : i32, i32
  }
  func.func @transform_5(%arg0: i32) -> (i32, i32) {
    %c0_i32 = arith.constant 0 : i32
    %c0_i32_0 = arith.constant 0 : i32
    %c0_i32_1 = arith.constant 0 : i32
    return %c0_i32, %c0_i32_0 : i32, i32
  }
  func.func @transform_6(%arg0: i32) -> (i32, i32) {
    %c0_i32 = arith.constant 0 : i32
    %c0_i32_0 = arith.constant 0 : i32
    %c0_i32_1 = arith.constant 0 : i32
    return %c0_i32, %c0_i32_0 : i32, i32
  }
  func.func @transform_7(%arg0: i32) -> (i32, i32, i32) {
    %c0_i32 = arith.constant 0 : i32
    %c0_i32_0 = arith.constant 0 : i32
    %c0_i32_1 = arith.constant 0 : i32
    return %arg0, %c0_i32, %c0_i32_0 : i32, i32, i32
  }
}

</mosaic_0001>

<llo_original>
// kernel: tpu_custom_call.1
$region0: #{tpu_custom_call.1}
  #allocation0 [shape = 'u32[]', space=smem, size = 0x4, offset = 0x4, fixed_abs, tag = 'smem constant byte address 0x4 - core index']
  #allocation1 [shape = 'u32[72,128]{1,0:T(1,128)}', space=vmem, size = 0x9000, scoped, tag = 'internal scratch']
  %s0 = inlined_call_operand.vmem [shape: f32[4,4,256], index: 0, kind: input, shape index: {}]
  %s1 = inlined_call_operand.vmem [shape: f32[9,256], index: 1, kind: input, shape index: {}]
  %s2 = inlined_call_operand.vmem [shape: f32[72,4], index: 2, kind: input, shape index: {}]
  %s3 = inlined_call_operand.vmem [shape: f32[8,2], index: 3, kind: input, shape index: {}]
  %s4 = inlined_call_operand.vmem [shape: f32[144,8], index: 4, kind: input, shape index: {}]
  %s5 = inlined_call_operand.vmem [shape: f32[16,3], index: 5, kind: input, shape index: {}]
  %s6 = inlined_call_operand.vmem [shape: f32[8,1], index: 6, kind: input, shape index: {}]
  %s7 = inlined_call_operand.hbm [shape: f32[4,8,256], index: 7, kind: output, shape index: {}]
  %s8 = sld [smem:[#allocation0]]
  $region61: #{tpu_custom_call.1} parent=0
    _
  %s10 = ssub.s32 1, %s8
  %s11 = scalar_select 0, %s10, %s8
  $region1: #{tpu_custom_call.1} parent=0
    #allocation2 [shape = 'u8[16384]{0}', space=vmem, size = 0x4000, scoped, tag = 'output window, operand 0']
    #allocation3 [shape = 's32[2]{0}', space=sflag, size = 0x8, scoped, tag = 'scoped memory for tpu_custom_call.1']
    %12 = vsyncpa [#allocation3], 0
    %s13 = scalar_lea.sflag [#allocation3], 1
    %14 = vsyncpa %s13, 0
    loop: start=0, step=1, limit=6
    $region2: #{tpu_custom_call.1} parent=1 // loop_pre_header
      _
    $region3: #{tpu_custom_call.1} parent=1 // loop_header
      %s16 = sphi 0, %s20
      %p17 = scmp.ge.s32.totalorder %s16, 6
      %s26 = sphi 0, %s28
      %s29 = sphi 0, %s26
      %s30 = sphi 0, %s29
      %s46 = sphi 0, %s30
      %s50 = sphi 0, %s50
      %s52 = sphi 0, %s50
      %s53 = sphi 0, %s52
      %s67 = sphi 0, %s53
      %s71 = sphi 0, %s71
      %s73 = sphi 0, %s71
      %s74 = sphi 0, %s73
      %s88 = sphi 0, %s74
      %s92 = sphi 0, %s92
      %s94 = sphi 0, %s92
      %s95 = sphi 0, %s94
      %s109 = sphi 0, %s95
      %s113 = sphi 0, %s113
      %s115 = sphi 0, %s113
      %s116 = sphi 0, %s115
      %s130 = sphi 0, %s116
      %s134 = sphi 0, %s134
      %s136 = sphi 0, %s134
      %s137 = sphi 0, %s136
      %s151 = sphi 0, %s137
      %s155 = sphi 0, %s155
      %s157 = sphi 0, %s155
      %s158 = sphi 0, %s157
      %s172 = sphi 0, %s158
      %s178 = sphi 0, %s180
      %s181 = sphi 0, %s178
      %s182 = sphi 0, %s181
      %s198 = sphi 0, %s182
    $region4: #{tpu_custom_call.1} parent=1 // loop_header_branch
      %19 = sbr.rel (%p17) target = $region8
    $region5: #{tpu_custom_call.1} parent=1 // loop_body
      %s21 = ssub.s32 %s16, 1
      %s22 = ssub.s32 %s16, 2
      %s23 = sadd.s32 %s16, 1
      %s24 = ssub.s32 %s16, %s23
      %p25 = scmp.eq.s32.totalorder %s24, 0
      %s27 = sadd.s32 %s26, 1
      %s28 = scalar_select %p25, %s26, %s27
      %p31 = pneg %p25
      %p32 = scmp.eq.s32.totalorder %s16, 3
      %p33 = por %p31, %p32
      %p34 = scmp.ne.s32.totalorder %s26, %s29
      %p35 = scmp.eq.s32.totalorder %s16, 0
      %p36 = por %p34, %p35
      %p37 = scmp.ne.s32.totalorder %s26, %s29
      %p38 = scmp.eq.s32.totalorder %s21, 3
      %p39 = por %p37, %p38
      %p40 = scmp.ne.s32.totalorder %s29, %s30
      %p41 = scmp.eq.s32.totalorder %s21, 0
      %p42 = por %p40, %p41
      %p43 = scmp.ne.s32.totalorder %s29, %s30
      %p44 = scmp.eq.s32.totalorder %s22, 3
      %p45 = por %p43, %p44
      %p47 = scmp.ne.s32.totalorder %s30, %s46
      %p48 = scmp.eq.s32.totalorder %s22, 0
      %p49 = por %p47, %p48
      %s51 = sadd.s32 %s50, 1
      %p54 = scmp.eq.s32.totalorder %s16, 3
      %p55 = scmp.ne.s32.totalorder %s50, %s52
      %p56 = scmp.eq.s32.totalorder %s16, 0
      %p57 = por %p55, %p56
      %p58 = scmp.ne.s32.totalorder %s50, %s52
      %p59 = scmp.eq.s32.totalorder %s21, 3
      %p60 = por %p58, %p59
      %p61 = scmp.ne.s32.totalorder %s52, %s53
      %p62 = scmp.eq.s32.totalorder %s21, 0
      %p63 = por %p61, %p62
      %p64 = scmp.ne.s32.totalorder %s52, %s53
      %p65 = scmp.eq.s32.totalorder %s22, 3
      %p66 = por %p64, %p65
      %p68 = scmp.ne.s32.totalorder %s53, %s67
      %p69 = scmp.eq.s32.totalorder %s22, 0
      %p70 = por %p68, %p69
      %s72 = sadd.s32 %s71, 1
      %p75 = scmp.eq.s32.totalorder %s16, 3
      %p76 = scmp.ne.s32.totalorder %s71, %s73
      %p77 = scmp.eq.s32.totalorder %s16, 0
      %p78 = por %p76, %p77
      %p79 = scmp.ne.s32.totalorder %s71, %s73
      %p80 = scmp.eq.s32.totalorder %s21, 3
      %p81 = por %p79, %p80
      %p82 = scmp.ne.s32.totalorder %s73, %s74
      %p83 = scmp.eq.s32.totalorder %s21, 0
      %p84 = por %p82, %p83
      %p85 = scmp.ne.s32.totalorder %s73, %s74
      %p86 = scmp.eq.s32.totalorder %s22, 3
      %p87 = por %p85, %p86
      %p89 = scmp.ne.s32.totalorder %s74, %s88
      %p90 = scmp.eq.s32.totalorder %s22, 0
      %p91 = por %p89, %p90
      %s93 = sadd.s32 %s92, 1
      %p96 = scmp.eq.s32.totalorder %s16, 3
      %p97 = scmp.ne.s32.totalorder %s92, %s94
      %p98 = scmp.eq.s32.totalorder %s16, 0
      %p99 = por %p97, %p98
      %p100 = scmp.ne.s32.totalorder %s92, %s94
      %p101 = scmp.eq.s32.totalorder %s21, 3
      %p102 = por %p100, %p101
      %p103 = scmp.ne.s32.totalorder %s94, %s95
      %p104 = scmp.eq.s32.totalorder %s21, 0
      %p105 = por %p103, %p104
      %p106 = scmp.ne.s32.totalorder %s94, %s95
      %p107 = scmp.eq.s32.totalorder %s22, 3
      %p108 = por %p106, %p107
      %p110 = scmp.ne.s32.totalorder %s95, %s109
      %p111 = scmp.eq.s32.totalorder %s22, 0
      %p112 = por %p110, %p111
      %s114 = sadd.s32 %s113, 1
      %p117 = scmp.eq.s32.totalorder %s16, 3
      %p118 = scmp.ne.s32.totalorder %s113, %s115
      %p119 = scmp.eq.s32.totalorder %s16, 0
      %p120 = por %p118, %p119
      %p121 = scmp.ne.s32.totalorder %s113, %s115
      %p122 = scmp.eq.s32.totalorder %s21, 3
      %p123 = por %p121, %p122
      %p124 = scmp.ne.s32.totalorder %s115, %s116
      %p125 = scmp.eq.s32.totalorder %s21, 0
      %p126 = por %p124, %p125
      %p127 = scmp.ne.s32.totalorder %s115, %s116
      %p128 = scmp.eq.s32.totalorder %s22, 3
      %p129 = por %p127, %p128
      %p131 = scmp.ne.s32.totalorder %s116, %s130
      %p132 = scmp.eq.s32.totalorder %s22, 0
      %p133 = por %p131, %p132
      %s135 = sadd.s32 %s134, 1
      %p138 = scmp.eq.s32.totalorder %s16, 3
      %p139 = scmp.ne.s32.totalorder %s134, %s136
      %p140 = scmp.eq.s32.totalorder %s16, 0
      %p141 = por %p139, %p140
      %p142 = scmp.ne.s32.totalorder %s134, %s136
      %p143 = scmp.eq.s32.totalorder %s21, 3
      %p144 = por %p142, %p143
      %p145 = scmp.ne.s32.totalorder %s136, %s137
      %p146 = scmp.eq.s32.totalorder %s21, 0
      %p147 = por %p145, %p146
      %p148 = scmp.ne.s32.totalorder %s136, %s137
      %p149 = scmp.eq.s32.totalorder %s22, 3
      %p150 = por %p148, %p149
      %p152 = scmp.ne.s32.totalorder %s137, %s151
      %p153 = scmp.eq.s32.totalorder %s22, 0
      %p154 = por %p152, %p153
      %s156 = sadd.s32 %s155, 1
      %p159 = scmp.eq.s32.totalorder %s16, 3
      %p160 = scmp.ne.s32.totalorder %s155, %s157
      %p161 = scmp.eq.s32.totalorder %s16, 0
      %p162 = por %p160, %p161
      %p163 = scmp.ne.s32.totalorder %s155, %s157
      %p164 = scmp.eq.s32.totalorder %s21, 3
      %p165 = por %p163, %p164
      %p166 = scmp.ne.s32.totalorder %s157, %s158
      %p167 = scmp.eq.s32.totalorder %s21, 0
      %p168 = por %p166, %p167
      %p169 = scmp.ne.s32.totalorder %s157, %s158
      %p170 = scmp.eq.s32.totalorder %s22, 3
      %p171 = por %p169, %p170
      %p173 = scmp.ne.s32.totalorder %s158, %s172
      %p174 = scmp.eq.s32.totalorder %s22, 0
      %p175 = por %p173, %p174
      %s176 = ssub.s32 %s16, %s23
      %p177 = scmp.eq.s32.totalorder %s176, 0
      %s179 = sadd.s32 %s178, 1
      %s180 = scalar_select %p177, %s178, %s179
      %p183 = pneg %p177
      %p184 = scmp.eq.s32.totalorder %s16, 3
      %p185 = por %p183, %p184
      %p186 = scmp.ne.s32.totalorder %s178, %s181
      %p187 = scmp.eq.s32.totalorder %s16, 0
      %p188 = por %p186, %p187
      %p189 = scmp.ne.s32.totalorder %s178, %s181
      %p190 = scmp.eq.s32.totalorder %s21, 3
      %p191 = por %p189, %p190
      %p192 = scmp.ne.s32.totalorder %s181, %s182
      %p193 = scmp.eq.s32.totalorder %s21, 0
      %p194 = por %p192, %p193
      %p195 = scmp.ne.s32.totalorder %s181, %s182
      %p196 = scmp.eq.s32.totalorder %s22, 3
      %p197 = por %p195, %p196
      %p199 = scmp.ne.s32.totalorder %s182, %s198
      %p200 = scmp.eq.s32.totalorder %s22, 0
      %p201 = por %p199, %p200
      %p202 = scmp.le.s32.totalorder 1, %s16
      %p203 = scmp.lt.s32.totalorder %s16, 5
      %p204 = pnand %p202, %p203
      %p205 = pneg %p204
      // Predicated region
      $region9: #{tpu_custom_call.1} parent=5 // pred_check
        _
      $region10: #{tpu_custom_call.1} parent=5 // pred_check_branch
        %207 = sbr.rel (%p204) target = $region12
      $region11: #{tpu_custom_call.1} parent=5 // pred_region
        %s208 = ssub.s32 %s16, 1
        // Predicated region
        $region13: #{tpu_custom_call.1} parent=11 // pred_check
          %p209 = pneg %p63
        $region14: #{tpu_custom_call.1} parent=11 // pred_check_branch
          %211 = sbr.rel (%p209) target = $region16
        $region15: #{tpu_custom_call.1} parent=11 // pred_region
          _
        $region16: #{tpu_custom_call.1} parent=11 // pred_fallthru
          _
        // Predicated region
        $region17: #{tpu_custom_call.1} parent=11 // pred_check
          %p212 = pneg %p84
        $region18: #{tpu_custom_call.1} parent=11 // pred_check_branch
          %214 = sbr.rel (%p212) target = $region20
        $region19: #{tpu_custom_call.1} parent=11 // pred_region
          _
        $region20: #{tpu_custom_call.1} parent=11 // pred_fallthru
          _
        // Predicated region
        $region21: #{tpu_custom_call.1} parent=11 // pred_check
          %p215 = pneg %p105
        $region22: #{tpu_custom_call.1} parent=11 // pred_check_branch
          %217 = sbr.rel (%p215) target = $region24
        $region23: #{tpu_custom_call.1} parent=11 // pred_region
          _
        $region24: #{tpu_custom_call.1} parent=11 // pred_fallthru
          _
        // Predicated region
        $region25: #{tpu_custom_call.1} parent=11 // pred_check
          %p218 = pneg %p126
        $region26: #{tpu_custom_call.1} parent=11 // pred_check_branch
          %220 = sbr.rel (%p218) target = $region28
        $region27: #{tpu_custom_call.1} parent=11 // pred_region
          _
        $region28: #{tpu_custom_call.1} parent=11 // pred_fallthru
          _
        // Predicated region
        $region29: #{tpu_custom_call.1} parent=11 // pred_check
          %p221 = pneg %p147
        $region30: #{tpu_custom_call.1} parent=11 // pred_check_branch
          %223 = sbr.rel (%p221) target = $region32
        $region31: #{tpu_custom_call.1} parent=11 // pred_region
          _
        $region32: #{tpu_custom_call.1} parent=11 // pred_fallthru
          _
        // Predicated region
        $region33: #{tpu_custom_call.1} parent=11 // pred_check
          %p224 = pneg %p168
        $region34: #{tpu_custom_call.1} parent=11 // pred_check_branch
          %226 = sbr.rel (%p224) target = $region36
        $region35: #{tpu_custom_call.1} parent=11 // pred_region
          _
        $region36: #{tpu_custom_call.1} parent=11 // pred_fallthru
          _
      $region12: #{tpu_custom_call.1} parent=5 // pred_fallthru
        _
      %p227 = scmp.lt.s32.totalorder %s16, 4
      // Predicated region
      $region37: #{tpu_custom_call.1} parent=5 // pred_check
        %p228 = pneg %p227
      $region38: #{tpu_custom_call.1} parent=5 // pred_check_branch
        %230 = sbr.rel (%p228) target = $region40
      $region39: #{tpu_custom_call.1} parent=5 // pred_region
        // Predicated region
        $region41: #{tpu_custom_call.1} parent=39 // pred_check
          %p231 = pneg %p36
        $region42: #{tpu_custom_call.1} parent=39 // pred_check_branch
          %233 = sbr.rel (%p231) target = $region44
        $region43: #{tpu_custom_call.1} parent=39 // pred_region
          %p234 = scmp.lt.s32.totalorder %s16, 3
          %s235 = scalar_select %p234, %s16, 3
          %s236 = smul.addr %s235, 2
          %s237 = smul.addr %s236, 4
          %s238 = scalar_lea.vmem %s0, %s237
        $region44: #{tpu_custom_call.1} parent=39 // pred_fallthru
          _
      $region40: #{tpu_custom_call.1} parent=5 // pred_fallthru
        _
      %p239 = scmp.le.s32.totalorder 1, %s16
      %p240 = scmp.lt.s32.totalorder %s16, 5
      %p241 = pnand %p239, %p240
      %p242 = pneg %p241
      // Predicated region
      $region45: #{tpu_custom_call.1} parent=5 // pred_check
        _
      $region46: #{tpu_custom_call.1} parent=5 // pred_check_branch
        %244 = sbr.rel (%p241) target = $region48
      $region47: #{tpu_custom_call.1} parent=5 // pred_region
        %s245 = ssub.s32 %s16, 1
        %p246 = scmp.lt.s32.totalorder %s21, 3
        %s247 = scalar_select %p246, %s21, 3
        %s248 = smul.addr %s247, 2
        %s249 = smul.addr %s248, 4
        %s250 = scalar_lea.vmem %s0, %s249
        %p251 = pneg %p42
        %p252 = pneg %p39
        %p253 = pneg %p63
        %p254 = pneg %p60
        %p255 = pneg %p84
        %p256 = pneg %p81
        %p257 = pneg %p105
        %p258 = pneg %p102
        %p259 = pneg %p126
        %p260 = pneg %p123
        %p261 = pneg %p147
        %p262 = pneg %p144
        %p263 = pneg %p168
        %p264 = pneg %p165
        %p265 = pneg %p194
        %p266 = pneg %p191
        %s267 = sand.u32 %s181, 1
        %s268 = scalar_lea.sflag [#allocation3], %s267
        %s269 = sand.u32 %s181, 1
        %s270 = smul.addr %s269, 16
        %s271 = scalar_lea.vmem [#allocation2], %s270
        %p272 = scmp.lt.s32.totalorder %s21, 3
        %s273 = scalar_select %p272, %s21, 3
        %s274 = smul.addr %s273, 2
        %s275 = smul.addr %s274, 4
        %s276 = scalar_lea.vmem %s0, %s275
        %v277 = vld [vmem:[%s1] sm:$0xff]
        %v278 = vld [vmem:[%s1 + $0x8] sm:$0xff]
        %v279 = vld [vmem:[%s1 + $0x10] sm:$0x1]
        %v280 = vld [vmem:[%s1 + $0x18] sm:$0x1]
        %v281 = vld [vmem:[%s276] sm:$0xff]
        %v282 = vld [vmem:[%s3] sm:$0xff]
        %284 = vst [vmem:[#allocation1] ss:$2 sm:$0xff] %v281
        %v285 = vld.sshfl [vmem:[#allocation1] sm:$0xff pattern:$0x75316420]
        %v286 = vld.sshfl [vmem:[#allocation1 + $0x8] sm:$0xff pattern:$0x75316420]
        %289 = vrot.lane.b32.xlu0 %v285, 17
        %v290 = vpop.permute.xlu0 %289
        %291 = vrot.lane.b32.xlu0 %v286, 17
        %v292 = vpop.permute.xlu0 %291
        %v293 = vlaneseq
        %v294 = vand.u32 %v293, 127
        %vm295 = vcmp.lt.s32.totalorder %v294, 17
        %v296 = vsel %vm295, %v290, %v292
        %v297 = vsel %vm295, %v292, %v290
        %v298 = vperm.slane %v277, 0
        %v299 = vperm.slane %v278, 0
        %v300 = vmul.f32 %v297, %v298
        %v301 = vmul.f32 %v296, %v299
        %v302 = vld [vmem:[%s2] sm:$0xff]
        %303 = vst [vmem:[#allocation1] ss:$2 sm:$0xff] %v281
        %v304 = vld.sshfl [vmem:[#allocation1] sm:$0xff pattern:$0x75316420]
        %v305 = vld.sshfl [vmem:[#allocation1 + $0x8] sm:$0xff pattern:$0x75316420]
        %308 = vrot.lane.b32.xlu0 %v304, 16
        %v309 = vpop.permute.xlu0 %308
        %310 = vrot.lane.b32.xlu0 %v305, 16
        %v311 = vpop.permute.xlu0 %310
        %vm312 = vcmp.lt.s32.totalorder %v294, 16
        %v313 = vsel %vm312, %v309, %v311
        %v314 = vsel %vm312, %v311, %v309
        %v315 = vperm.slane %v277, 1
        %v316 = vperm.slane %v278, 1
        %v317 = vmul.f32 %v314, %v315
        %v318 = vmul.f32 %v313, %v316
        %v319 = vld [vmem:[%s2 + $0x8] sm:$0xff]
        %vm320 = vcmask 31744
        %v322 = vsel %vm320, %v319, 0
        %vm324 = vcmask 1043456
        %v326 = vsel %vm324, %v317, 0
        %v329 = vsel %vm324, %v318, 0
        %331 = vmatpush.msra.mxu0 0.0
        %332 = vmatpush.msra.mxu0 0.0
        %333 = vmatpush.msra.mxu0 0.0
        %334 = vmatpush.msra.mxu0 0.0
        %335 = vmatpush.msra.mxu0 0.0
        %336 = vmatpush.msra.mxu0 0.0
        %337 = vmatpush.msra.mxu0 0.0
        %338 = vmatpush.msra.mxu0 0.0
        %339 = vmatpush.msra.mxu0 0.0
        %340 = vmatpush.msra.mxu0 0.0
        %341 = vmatpush.msra.mxu0 0.0
        %342 = vmatpush.msra.mxu0 0.0
        %343 = vmatpush.msra.mxu0 0.0
        %344 = vmatpush.msra.mxu0 0.0
        %345 = vmatpush.msra.mxu0 0.0
        %346 = vmatpush.msra.mxu0 %v326
        %347 = vmatmul.f32.gmra.mxu0 %v322
        %v348 = vpop.f32.mrf.mxu0
        %v349 = vadd.f32 0.0, %v348
        %350 = vdwg.mxu0
        %351 = vmatpush.msra.mxu0 0.0
        %352 = vmatpush.msra.mxu0 0.0
        %353 = vmatpush.msra.mxu0 0.0
        %354 = vmatpush.msra.mxu0 0.0
        %355 = vmatpush.msra.mxu0 0.0
        %356 = vmatpush.msra.mxu0 0.0
        %357 = vmatpush.msra.mxu0 0.0
        %358 = vmatpush.msra.mxu0 0.0
        %359 = vmatpush.msra.mxu0 0.0
        %360 = vmatpush.msra.mxu0 0.0
        %361 = vmatpush.msra.mxu0 0.0
        %362 = vmatpush.msra.mxu0 0.0
        %363 = vmatpush.msra.mxu0 0.0
        %364 = vmatpush.msra.mxu0 0.0
        %365 = vmatpush.msra.mxu0 0.0
        %366 = vmatpush.msra.mxu0 %v329
        %367 = vmatmul.f32.gmra.mxu0 %v322
        %v368 = vpop.f32.mrf.mxu0
        %v369 = vadd.f32 0.0, %v368
        %370 = vdwg.mxu0
        %v372 = vsel %vm320, %v302, 0
        %v375 = vsel %vm324, %v300, 0
        %v378 = vsel %vm324, %v301, 0
        %380 = vmatpush.msra.mxu0 0.0
        %381 = vmatpush.msra.mxu0 0.0
        %382 = vmatpush.msra.mxu0 0.0
        %383 = vmatpush.msra.mxu0 0.0
        %384 = vmatpush.msra.mxu0 0.0
        %385 = vmatpush.msra.mxu0 0.0
        %386 = vmatpush.msra.mxu0 0.0
        %387 = vmatpush.msra.mxu0 0.0
        %388 = vmatpush.msra.mxu0 0.0
        %389 = vmatpush.msra.mxu0 0.0
        %390 = vmatpush.msra.mxu0 0.0
        %391 = vmatpush.msra.mxu0 0.0
        %392 = vmatpush.msra.mxu0 0.0
        %393 = vmatpush.msra.mxu0 0.0
        %394 = vmatpush.msra.mxu0 0.0
        %395 = vmatpush.msra.mxu0 %v375
        %396 = vmatmul.f32.gmra.mxu0 %v372
        %v397 = vpop.f32.mrf.mxu0
        %v398 = vadd.f32 %v349, %v397
        %399 = vdwg.mxu0
        %400 = vmatpush.msra.mxu0 0.0
        %401 = vmatpush.msra.mxu0 0.0
        %402 = vmatpush.msra.mxu0 0.0
        %403 = vmatpush.msra.mxu0 0.0
        %404 = vmatpush.msra.mxu0 0.0
        %405 = vmatpush.msra.mxu0 0.0
        %406 = vmatpush.msra.mxu0 0.0
        %407 = vmatpush.msra.mxu0 0.0
        %408 = vmatpush.msra.mxu0 0.0
        %409 = vmatpush.msra.mxu0 0.0
        %410 = vmatpush.msra.mxu0 0.0
        %411 = vmatpush.msra.mxu0 0.0
        %412 = vmatpush.msra.mxu0 0.0
        %413 = vmatpush.msra.mxu0 0.0
        %414 = vmatpush.msra.mxu0 0.0
        %415 = vmatpush.msra.mxu0 %v378
        %416 = vmatmul.f32.gmra.mxu0 %v372
        %v417 = vpop.f32.mrf.mxu0
        %v418 = vadd.f32 %v369, %v417
        %419 = vdwg.mxu0
        %420 = vst [vmem:[#allocation1] ss:$2 sm:$0xff] %v281
        %v421 = vld.sshfl [vmem:[#allocation1] sm:$0xff pattern:$0x75316420]
        %v422 = vld.sshfl [vmem:[#allocation1 + $0x8] sm:$0xff pattern:$0x75316420]
        %425 = vrot.lane.b32.xlu0 %v421, 15
        %v426 = vpop.permute.xlu0 %425
        %427 = vrot.lane.b32.xlu0 %v422, 15
        %v428 = vpop.permute.xlu0 %427
        %vm429 = vcmp.lt.s32.totalorder %v294, 15
        %v430 = vsel %vm429, %v426, %v428
        %v431 = vsel %vm429, %v428, %v426
        %v432 = vperm.slane %v277, 2
        %v433 = vperm.slane %v278, 2
        %v434 = vmul.f32 %v431, %v432
        %v435 = vmul.f32 %v430, %v433
        %v436 = vld [vmem:[%s2 + $0x10] sm:$0xff]
        %v438 = vsel %vm320, %v436, 0
        %v441 = vsel %vm324, %v434, 0
        %v444 = vsel %vm324, %v435, 0
        %446 = vmatpush.msra.mxu0 0.0
        %447 = vmatpush.msra.mxu0 0.0
        %448 = vmatpush.msra.mxu0 0.0
        %449 = vmatpush.msra.mxu0 0.0
        %450 = vmatpush.msra.mxu0 0.0
        %451 = vmatpush.msra.mxu0 0.0
        %452 = vmatpush.msra.mxu0 0.0
        %453 = vmatpush.msra.mxu0 0.0
        %454 = vmatpush.msra.mxu0 0.0
        %455 = vmatpush.msra.mxu0 0.0
        %456 = vmatpush.msra.mxu0 0.0
        %457 = vmatpush.msra.mxu0 0.0
        %458 = vmatpush.msra.mxu0 0.0
        %459 = vmatpush.msra.mxu0 0.0
        %460 = vmatpush.msra.mxu0 0.0
        %461 = vmatpush.msra.mxu0 %v441
        %462 = vmatmul.f32.gmra.mxu0 %v438
        %v463 = vpop.f32.mrf.mxu0
        %v464 = vadd.f32 0.0, %v463
        %465 = vdwg.mxu0
        %466 = vmatpush.msra.mxu0 0.0
        %467 = vmatpush.msra.mxu0 0.0
        %468 = vmatpush.msra.mxu0 0.0
        %469 = vmatpush.msra.mxu0 0.0
        %470 = vmatpush.msra.mxu0 0.0
        %471 = vmatpush.msra.mxu0 0.0
        %472 = vmatpush.msra.mxu0 0.0
        %473 = vmatpush.msra.mxu0 0.0
        %474 = vmatpush.msra.mxu0 0.0
        %475 = vmatpush.msra.mxu0 0.0
        %476 = vmatpush.msra.mxu0 0.0
        %477 = vmatpush.msra.mxu0 0.0
        %478 = vmatpush.msra.mxu0 0.0
        %479 = vmatpush.msra.mxu0 0.0
        %480 = vmatpush.msra.mxu0 0.0
        %481 = vmatpush.msra.mxu0 %v444
        %482 = vmatmul.f32.gmra.mxu0 %v438
        %v483 = vpop.f32.mrf.mxu0
        %v484 = vadd.f32 0.0, %v483
        %485 = vdwg.mxu0
        %v486 = vadd.f32 %v398, %v464
        %v487 = vadd.f32 %v418, %v484
        %488 = vst [vmem:[#allocation1] ss:$2 sm:$0xff] %v281
        %v489 = vld.sshfl [vmem:[#allocation1] sm:$0xff pattern:$0x75316420]
        %v490 = vld.sshfl [vmem:[#allocation1 + $0x8] sm:$0xff pattern:$0x75316420]
        %493 = vrot.lane.b32.xlu0 %v489, 1
        %v494 = vpop.permute.xlu0 %493
        %495 = vrot.lane.b32.xlu0 %v490, 1
        %v496 = vpop.permute.xlu0 %495
        %vm497 = vcmp.lt.s32.totalorder %v294, 1
        %v498 = vsel %vm497, %v494, %v496
        %v499 = vsel %vm497, %v496, %v494
        %v500 = vperm.slane %v277, 3
        %v501 = vperm.slane %v278, 3
        %v502 = vmul.f32 %v499, %v500
        %v503 = vmul.f32 %v498, %v501
        %v504 = vld [vmem:[%s2 + $0x18] sm:$0xff]
        %v506 = vsel %vm320, %v504, 0
        %v509 = vsel %vm324, %v502, 0
        %v512 = vsel %vm324, %v503, 0
        %514 = vmatpush.msra.mxu0 0.0
        %515 = vmatpush.msra.mxu0 0.0
        %516 = vmatpush.msra.mxu0 0.0
        %517 = vmatpush.msra.mxu0 0.0
        %518 = vmatpush.msra.mxu0 0.0
        %519 = vmatpush.msra.mxu0 0.0
        %520 = vmatpush.msra.mxu0 0.0
        %521 = vmatpush.msra.mxu0 0.0
        %522 = vmatpush.msra.mxu0 0.0
        %523 = vmatpush.msra.mxu0 0.0
        %524 = vmatpush.msra.mxu0 0.0
        %525 = vmatpush.msra.mxu0 0.0
        %526 = vmatpush.msra.mxu0 0.0
        %527 = vmatpush.msra.mxu0 0.0
        %528 = vmatpush.msra.mxu0 0.0
        %529 = vmatpush.msra.mxu0 %v509
        %530 = vmatmul.f32.gmra.mxu0 %v506
        %v531 = vpop.f32.mrf.mxu0
        %v532 = vadd.f32 0.0, %v531
        %533 = vdwg.mxu0
        %534 = vmatpush.msra.mxu0 0.0
        %535 = vmatpush.msra.mxu0 0.0
        %536 = vmatpush.msra.mxu0 0.0
        %537 = vmatpush.msra.mxu0 0.0
        %538 = vmatpush.msra.mxu0 0.0
        %539 = vmatpush.msra.mxu0 0.0
        %540 = vmatpush.msra.mxu0 0.0
        %541 = vmatpush.msra.mxu0 0.0
        %542 = vmatpush.msra.mxu0 0.0
        %543 = vmatpush.msra.mxu0 0.0
        %544 = vmatpush.msra.mxu0 0.0
        %545 = vmatpush.msra.mxu0 0.0
        %546 = vmatpush.msra.mxu0 0.0
        %547 = vmatpush.msra.mxu0 0.0
        %548 = vmatpush.msra.mxu0 0.0
        %549 = vmatpush.msra.mxu0 %v512
        %550 = vmatmul.f32.gmra.mxu0 %v506
        %v551 = vpop.f32.mrf.mxu0
        %v552 = vadd.f32 0.0, %v551
        %553 = vdwg.mxu0
        %v554 = vadd.f32 %v486, %v532
        %v555 = vadd.f32 %v487, %v552
        %v556 = vperm.slane %v277, 4
        %v557 = vperm.slane %v278, 4
        %v560 = vrot.slane %v557, 4
        %v561 = vsel %vm324, %v556, %v560
        %v563 = vmul.f32 %v281, %v561
        %v564 = vld [vmem:[%s2 + $0x20] sm:$0xff]
        %566 = vst [vmem:[#allocation1] ss:$2 sm:$0xff] %v563
        %v567 = vld.sshfl [vmem:[#allocation1] sm:$0xff pattern:$0x75316420]
        %v568 = vld.sshfl [vmem:[#allocation1 + $0x8] sm:$0xff pattern:$0x75316420]
        %v570 = vsel %vm320, %v564, 0
        %v572 = vsel %vm324, %v567, 0
        %v574 = vsel %vm324, %v568, 0
        %576 = vmatpush.msra.mxu0 0.0
        %577 = vmatpush.msra.mxu0 0.0
        %578 = vmatpush.msra.mxu0 0.0
        %579 = vmatpush.msra.mxu0 0.0
        %580 = vmatpush.msra.mxu0 0.0
        %581 = vmatpush.msra.mxu0 0.0
        %582 = vmatpush.msra.mxu0 0.0
        %583 = vmatpush.msra.mxu0 0.0
        %584 = vmatpush.msra.mxu0 0.0
        %585 = vmatpush.msra.mxu0 0.0
        %586 = vmatpush.msra.mxu0 0.0
        %587 = vmatpush.msra.mxu0 0.0
        %588 = vmatpush.msra.mxu0 0.0
        %589 = vmatpush.msra.mxu0 0.0
        %590 = vmatpush.msra.mxu0 0.0
        %591 = vmatpush.msra.mxu0 %v572
        %592 = vmatmul.f32.gmra.mxu0 %v570
        %v593 = vpop.f32.mrf.mxu0
        %v594 = vadd.f32 0.0, %v593
        %595 = vdwg.mxu0
        %596 = vmatpush.msra.mxu0 0.0
        %597 = vmatpush.msra.mxu0 0.0
        %598 = vmatpush.msra.mxu0 0.0
        %599 = vmatpush.msra.mxu0 0.0
        %600 = vmatpush.msra.mxu0 0.0
        %601 = vmatpush.msra.mxu0 0.0
        %602 = vmatpush.msra.mxu0 0.0
        %603 = vmatpush.msra.mxu0 0.0
        %604 = vmatpush.msra.mxu0 0.0
        %605 = vmatpush.msra.mxu0 0.0
        %606 = vmatpush.msra.mxu0 0.0
        %607 = vmatpush.msra.mxu0 0.0
        %608 = vmatpush.msra.mxu0 0.0
        %609 = vmatpush.msra.mxu0 0.0
        %610 = vmatpush.msra.mxu0 0.0
        %611 = vmatpush.msra.mxu0 %v574
        %612 = vmatmul.f32.gmra.mxu0 %v570
        %v613 = vpop.f32.mrf.mxu0
        %v614 = vadd.f32 0.0, %v613
        %615 = vdwg.mxu0
        %v616 = vadd.f32 %v554, %v594
        %v617 = vadd.f32 %v555, %v614
        %618 = vst [vmem:[#allocation1] ss:$2 sm:$0xff] %v281
        %v619 = vld.sshfl [vmem:[#allocation1] sm:$0xff pattern:$0x75316420]
        %v620 = vld.sshfl [vmem:[#allocation1 + $0x8] sm:$0xff pattern:$0x75316420]
        %623 = vrot.lane.b32.xlu0 %v619, 127
        %v624 = vpop.permute.xlu0 %623
        %625 = vrot.lane.b32.xlu0 %v620, 127
        %v626 = vpop.permute.xlu0 %625
        %vm627 = vcmp.lt.s32.totalorder %v294, 127
        %v628 = vsel %vm627, %v624, %v626
        %v629 = vsel %vm627, %v626, %v624
        %v630 = vperm.slane %v277, 5
        %v631 = vperm.slane %v278, 5
        %v632 = vmul.f32 %v628, %v630
        %v633 = vmul.f32 %v629, %v631
        %v634 = vld [vmem:[%s2 + $0x28] sm:$0xff]
        %v636 = vsel %vm320, %v634, 0
        %v639 = vsel %vm324, %v632, 0
        %v642 = vsel %vm324, %v633, 0
        %644 = vmatpush.msra.mxu0 0.0
        %645 = vmatpush.msra.mxu0 0.0
        %646 = vmatpush.msra.mxu0 0.0
        %647 = vmatpush.msra.mxu0 0.0
        %648 = vmatpush.msra.mxu0 0.0
        %649 = vmatpush.msra.mxu0 0.0
        %650 = vmatpush.msra.mxu0 0.0
        %651 = vmatpush.msra.mxu0 0.0
        %652 = vmatpush.msra.mxu0 0.0
        %653 = vmatpush.msra.mxu0 0.0
        %654 = vmatpush.msra.mxu0 0.0
        %655 = vmatpush.msra.mxu0 0.0
        %656 = vmatpush.msra.mxu0 0.0
        %657 = vmatpush.msra.mxu0 0.0
        %658 = vmatpush.msra.mxu0 0.0
        %659 = vmatpush.msra.mxu0 %v639
        %660 = vmatmul.f32.gmra.mxu0 %v636
        %v661 = vpop.f32.mrf.mxu0
        %v662 = vadd.f32 0.0, %v661
        %663 = vdwg.mxu0
        %664 = vmatpush.msra.mxu0 0.0
        %665 = vmatpush.msra.mxu0 0.0
        %666 = vmatpush.msra.mxu0 0.0
        %667 = vmatpush.msra.mxu0 0.0
        %668 = vmatpush.msra.mxu0 0.0
        %669 = vmatpush.msra.mxu0 0.0
        %670 = vmatpush.msra.mxu0 0.0
        %671 = vmatpush.msra.mxu0 0.0
        %672 = vmatpush.msra.mxu0 0.0
        %673 = vmatpush.msra.mxu0 0.0
        %674 = vmatpush.msra.mxu0 0.0
        %675 = vmatpush.msra.mxu0 0.0
        %676 = vmatpush.msra.mxu0 0.0
        %677 = vmatpush.msra.mxu0 0.0
        %678 = vmatpush.msra.mxu0 0.0
        %679 = vmatpush.msra.mxu0 %v642
        %680 = vmatmul.f32.gmra.mxu0 %v636
        %v681 = vpop.f32.mrf.mxu0
        %v682 = vadd.f32 0.0, %v681
        %683 = vdwg.mxu0
        %v684 = vadd.f32 %v616, %v662
        %v685 = vadd.f32 %v617, %v682
        %686 = vst [vmem:[#allocation1] ss:$2 sm:$0xff] %v281
        %v687 = vld.sshfl [vmem:[#allocation1] sm:$0xff pattern:$0x75316420]
        %v688 = vld.sshfl [vmem:[#allocation1 + $0x8] sm:$0xff pattern:$0x75316420]
        %691 = vrot.lane.b32.xlu0 %v687, 113
        %v692 = vpop.permute.xlu0 %691
        %693 = vrot.lane.b32.xlu0 %v688, 113
        %v694 = vpop.permute.xlu0 %693
        %vm695 = vcmp.lt.s32.totalorder %v294, 113
        %v696 = vsel %vm695, %v692, %v694
        %v697 = vsel %vm695, %v694, %v692
        %v698 = vperm.slane %v277, 6
        %v699 = vperm.slane %v278, 6
        %v700 = vmul.f32 %v696, %v698
        %v701 = vmul.f32 %v697, %v699
        %v702 = vld [vmem:[%s2 + $0x30] sm:$0xff]
        %v704 = vsel %vm320, %v702, 0
        %v707 = vsel %vm324, %v700, 0
        %v710 = vsel %vm324, %v701, 0
        %712 = vmatpush.msra.mxu0 0.0
        %713 = vmatpush.msra.mxu0 0.0
        %714 = vmatpush.msra.mxu0 0.0
        %715 = vmatpush.msra.mxu0 0.0
        %716 = vmatpush.msra.mxu0 0.0
        %717 = vmatpush.msra.mxu0 0.0
        %718 = vmatpush.msra.mxu0 0.0
        %719 = vmatpush.msra.mxu0 0.0
        %720 = vmatpush.msra.mxu0 0.0
        %721 = vmatpush.msra.mxu0 0.0
        %722 = vmatpush.msra.mxu0 0.0
        %723 = vmatpush.msra.mxu0 0.0
        %724 = vmatpush.msra.mxu0 0.0
        %725 = vmatpush.msra.mxu0 0.0
        %726 = vmatpush.msra.mxu0 0.0
        %727 = vmatpush.msra.mxu0 %v707
        %728 = vmatmul.f32.gmra.mxu0 %v704
        %v729 = vpop.f32.mrf.mxu0
        %v730 = vadd.f32 0.0, %v729
        %731 = vdwg.mxu0
        %732 = vmatpush.msra.mxu0 0.0
        %733 = vmatpush.msra.mxu0 0.0
        %734 = vmatpush.msra.mxu0 0.0
        %735 = vmatpush.msra.mxu0 0.0
        %736 = vmatpush.msra.mxu0 0.0
        %737 = vmatpush.msra.mxu0 0.0
        %738 = vmatpush.msra.mxu0 0.0
        %739 = vmatpush.msra.mxu0 0.0
        %740 = vmatpush.msra.mxu0 0.0
        %741 = vmatpush.msra.mxu0 0.0
        %742 = vmatpush.msra.mxu0 0.0
        %743 = vmatpush.msra.mxu0 0.0
        %744 = vmatpush.msra.mxu0 0.0
        %745 = vmatpush.msra.mxu0 0.0
        %746 = vmatpush.msra.mxu0 0.0
        %747 = vmatpush.msra.mxu0 %v710
        %748 = vmatmul.f32.gmra.mxu0 %v704
        %v749 = vpop.f32.mrf.mxu0
        %v750 = vadd.f32 0.0, %v749
        %751 = vdwg.mxu0
        %v752 = vadd.f32 %v684, %v730
        %v753 = vadd.f32 %v685, %v750
        %754 = vst [vmem:[#allocation1] ss:$2 sm:$0xff] %v281
        %v755 = vld.sshfl [vmem:[#allocation1] sm:$0xff pattern:$0x75316420]
        %v756 = vld.sshfl [vmem:[#allocation1 + $0x8] sm:$0xff pattern:$0x75316420]
        %759 = vrot.lane.b32.xlu0 %v755, 112
        %v760 = vpop.permute.xlu0 %759
        %761 = vrot.lane.b32.xlu0 %v756, 112
        %v762 = vpop.permute.xlu0 %761
        %vm763 = vcmp.lt.s32.totalorder %v294, 112
        %v764 = vsel %vm763, %v760, %v762
        %v765 = vsel %vm763, %v762, %v760
        %v766 = vperm.slane %v277, 7
        %v767 = vperm.slane %v278, 7
        %v768 = vmul.f32 %v764, %v766
        %v769 = vmul.f32 %v765, %v767
        %v770 = vld [vmem:[%s2 + $0x38] sm:$0xff]
        %v772 = vsel %vm320, %v770, 0
        %v775 = vsel %vm324, %v768, 0
        %v778 = vsel %vm324, %v769, 0
        %780 = vmatpush.msra.mxu0 0.0
        %781 = vmatpush.msra.mxu0 0.0
        %782 = vmatpush.msra.mxu0 0.0
        %783 = vmatpush.msra.mxu0 0.0
        %784 = vmatpush.msra.mxu0 0.0
        %785 = vmatpush.msra.mxu0 0.0
        %786 = vmatpush.msra.mxu0 0.0
        %787 = vmatpush.msra.mxu0 0.0
        %788 = vmatpush.msra.mxu0 0.0
        %789 = vmatpush.msra.mxu0 0.0
        %790 = vmatpush.msra.mxu0 0.0
        %791 = vmatpush.msra.mxu0 0.0
        %792 = vmatpush.msra.mxu0 0.0
        %793 = vmatpush.msra.mxu0 0.0
        %794 = vmatpush.msra.mxu0 0.0
        %795 = vmatpush.msra.mxu0 %v775
        %796 = vmatmul.f32.gmra.mxu0 %v772
        %v797 = vpop.f32.mrf.mxu0
        %v798 = vadd.f32 0.0, %v797
        %799 = vdwg.mxu0
        %800 = vmatpush.msra.mxu0 0.0
        %801 = vmatpush.msra.mxu0 0.0
        %802 = vmatpush.msra.mxu0 0.0
        %803 = vmatpush.msra.mxu0 0.0
        %804 = vmatpush.msra.mxu0 0.0
        %805 = vmatpush.msra.mxu0 0.0
        %806 = vmatpush.msra.mxu0 0.0
        %807 = vmatpush.msra.mxu0 0.0
        %808 = vmatpush.msra.mxu0 0.0
        %809 = vmatpush.msra.mxu0 0.0
        %810 = vmatpush.msra.mxu0 0.0
        %811 = vmatpush.msra.mxu0 0.0
        %812 = vmatpush.msra.mxu0 0.0
        %813 = vmatpush.msra.mxu0 0.0
        %814 = vmatpush.msra.mxu0 0.0
        %815 = vmatpush.msra.mxu0 %v778
        %816 = vmatmul.f32.gmra.mxu0 %v772
        %v817 = vpop.f32.mrf.mxu0
        %v818 = vadd.f32 0.0, %v817
        %819 = vdwg.mxu0
        %v820 = vadd.f32 %v752, %v798
        %v821 = vadd.f32 %v753, %v818
        %822 = vst [vmem:[#allocation1] ss:$2 sm:$0xff] %v281
        %v823 = vld.sshfl [vmem:[#allocation1] sm:$0xff pattern:$0x75316420]
        %v824 = vld.sshfl [vmem:[#allocation1 + $0x8] sm:$0xff pattern:$0x75316420]
        %827 = vrot.lane.b32.xlu0 %v823, 111
        %v828 = vpop.permute.xlu0 %827
        %829 = vrot.lane.b32.xlu0 %v824, 111
        %v830 = vpop.permute.xlu0 %829
        %vm831 = vcmp.lt.s32.totalorder %v294, 111
        %v832 = vsel %vm831, %v828, %v830
        %v833 = vsel %vm831, %v830, %v828
        %v834 = vperm.slane %v279, 0
        %v835 = vperm.slane %v280, 0
        %v836 = vmul.f32 %v832, %v834
        %v837 = vmul.f32 %v833, %v835
        %v838 = vld [vmem:[%s2 + $0x40] sm:$0xff]
        %v840 = vsel %vm320, %v838, 0
        %v843 = vsel %vm324, %v836, 0
        %v846 = vsel %vm324, %v837, 0
        %848 = vmatpush.msra.mxu0 0.0
        %849 = vmatpush.msra.mxu0 0.0
        %850 = vmatpush.msra.mxu0 0.0
        %851 = vmatpush.msra.mxu0 0.0
        %852 = vmatpush.msra.mxu0 0.0
        %853 = vmatpush.msra.mxu0 0.0
        %854 = vmatpush.msra.mxu0 0.0
        %855 = vmatpush.msra.mxu0 0.0
        %856 = vmatpush.msra.mxu0 0.0
        %857 = vmatpush.msra.mxu0 0.0
        %858 = vmatpush.msra.mxu0 0.0
        %859 = vmatpush.msra.mxu0 0.0
        %860 = vmatpush.msra.mxu0 0.0
        %861 = vmatpush.msra.mxu0 0.0
        %862 = vmatpush.msra.mxu0 0.0
        %863 = vmatpush.msra.mxu0 %v843
        %864 = vmatmul.f32.gmra.mxu0 %v840
        %v865 = vpop.f32.mrf.mxu0
        %v866 = vadd.f32 0.0, %v865
        %867 = vdwg.mxu0
        %868 = vmatpush.msra.mxu0 0.0
        %869 = vmatpush.msra.mxu0 0.0
        %870 = vmatpush.msra.mxu0 0.0
        %871 = vmatpush.msra.mxu0 0.0
        %872 = vmatpush.msra.mxu0 0.0
        %873 = vmatpush.msra.mxu0 0.0
        %874 = vmatpush.msra.mxu0 0.0
        %875 = vmatpush.msra.mxu0 0.0
        %876 = vmatpush.msra.mxu0 0.0
        %877 = vmatpush.msra.mxu0 0.0
        %878 = vmatpush.msra.mxu0 0.0
        %879 = vmatpush.msra.mxu0 0.0
        %880 = vmatpush.msra.mxu0 0.0
        %881 = vmatpush.msra.mxu0 0.0
        %882 = vmatpush.msra.mxu0 0.0
        %883 = vmatpush.msra.mxu0 %v846
        %884 = vmatmul.f32.gmra.mxu0 %v840
        %v885 = vpop.f32.mrf.mxu0
        %v886 = vadd.f32 0.0, %v885
        %887 = vdwg.mxu0
        %v888 = vadd.f32 %v820, %v866
        %v889 = vadd.f32 %v821, %v886
        %891 = vset.pattern.permute.xlu0 0
        %892 = vperm.xlu0 %891, %v282
        %v893 = vpop.permute.xlu0 %892
        %v895 = vmul.f32 %v888, %v893
        %v896 = vmul.f32 %v889, %v893
        %897 = vset.pattern.permute.xlu0 1
        %898 = vperm.xlu0 %897, %v282
        %v899 = vpop.permute.xlu0 %898
        %v901 = vadd.f32 %v895, %v899
        %v902 = vadd.f32 %v896, %v899
        %v903 = vmax.f32 %v901, 0.0
        %v904 = vmax.f32 %v902, 0.0
        %v905 = vld [vmem:[%s5] sm:$0xff]
        %906 = vrot.lane.b32.xlu0 %v903, 17
        %v907 = vpop.permute.xlu0 %906
        %908 = vrot.lane.b32.xlu0 %v904, 17
        %v909 = vpop.permute.xlu0 %908
        %v910 = vsel %vm295, %v907, %v909
        %v911 = vsel %vm295, %v909, %v907
        %v912 = vmul.f32 %v911, %v298
        %v913 = vmul.f32 %v910, %v299
        %v914 = vld [vmem:[%s4] sm:$0xff]
        %915 = vrot.lane.b32.xlu0 %v903, 16
        %v916 = vpop.permute.xlu0 %915
        %917 = vrot.lane.b32.xlu0 %v904, 16
        %v918 = vpop.permute.xlu0 %917
        %v919 = vsel %vm312, %v916, %v918
        %v920 = vsel %vm312, %v918, %v916
        %v921 = vmul.f32 %v920, %v315
        %v922 = vmul.f32 %v919, %v316
        %v923 = vld [vmem:[%s4 + $0x8] sm:$0xff]
        %vm924 = vcmask 64512
        %v926 = vsel %vm924, %v923, 0
        %928 = vmatpush.msra.mxu0 0.0
        %929 = vmatpush.msra.mxu0 0.0
        %930 = vmatpush.msra.mxu0 0.0
        %931 = vmatpush.msra.mxu0 0.0
        %932 = vmatpush.msra.mxu0 0.0
        %933 = vmatpush.msra.mxu0 0.0
        %934 = vmatpush.msra.mxu0 0.0
        %935 = vmatpush.msra.mxu0 0.0
        %936 = vmatpush.msra.mxu0 0.0
        %937 = vmatpush.msra.mxu0 0.0
        %938 = vmatpush.msra.mxu0 0.0
        %939 = vmatpush.msra.mxu0 0.0
        %940 = vmatpush.msra.mxu0 0.0
        %941 = vmatpush.msra.mxu0 0.0
        %942 = vmatpush.msra.mxu0 0.0
        %943 = vmatpush.msra.mxu0 %v921
        %944 = vmatmul.f32.gmra.mxu0 %v926
        %v945 = vpop.f32.mrf.mxu0
        %v946 = vadd.f32 0.0, %v945
        %947 = vdwg.mxu0
        %948 = vmatpush.msra.mxu0 0.0
        %949 = vmatpush.msra.mxu0 0.0
        %950 = vmatpush.msra.mxu0 0.0
        %951 = vmatpush.msra.mxu0 0.0
        %952 = vmatpush.msra.mxu0 0.0
        %953 = vmatpush.msra.mxu0 0.0
        %954 = vmatpush.msra.mxu0 0.0
        %955 = vmatpush.msra.mxu0 0.0
        %956 = vmatpush.msra.mxu0 0.0
        %957 = vmatpush.msra.mxu0 0.0
        %958 = vmatpush.msra.mxu0 0.0
        %959 = vmatpush.msra.mxu0 0.0
        %960 = vmatpush.msra.mxu0 0.0
        %961 = vmatpush.msra.mxu0 0.0
        %962 = vmatpush.msra.mxu0 0.0
        %963 = vmatpush.msra.mxu0 %v922
        %964 = vmatmul.f32.gmra.mxu0 %v926
        %v965 = vpop.f32.mrf.mxu0
        %v966 = vadd.f32 0.0, %v965
        %967 = vdwg.mxu0
        %v969 = vsel %vm924, %v914, 0
        %971 = vmatpush.msra.mxu0 0.0
        %972 = vmatpush.msra.mxu0 0.0
        %973 = vmatpush.msra.mxu0 0.0
        %974 = vmatpush.msra.mxu0 0.0
        %975 = vmatpush.msra.mxu0 0.0
        %976 = vmatpush.msra.mxu0 0.0
        %977 = vmatpush.msra.mxu0 0.0
        %978 = vmatpush.msra.mxu0 0.0
        %979 = vmatpush.msra.mxu0 0.0
        %980 = vmatpush.msra.mxu0 0.0
        %981 = vmatpush.msra.mxu0 0.0
        %982 = vmatpush.msra.mxu0 0.0
        %983 = vmatpush.msra.mxu0 0.0
        %984 = vmatpush.msra.mxu0 0.0
        %985 = vmatpush.msra.mxu0 0.0
        %986 = vmatpush.msra.mxu0 %v912
        %987 = vmatmul.f32.gmra.mxu0 %v969
        %v988 = vpop.f32.mrf.mxu0
        %v989 = vadd.f32 %v946, %v988
        %990 = vdwg.mxu0
        %991 = vmatpush.msra.mxu0 0.0
        %992 = vmatpush.msra.mxu0 0.0
        %993 = vmatpush.msra.mxu0 0.0
        %994 = vmatpush.msra.mxu0 0.0
        %995 = vmatpush.msra.mxu0 0.0
        %996 = vmatpush.msra.mxu0 0.0
        %997 = vmatpush.msra.mxu0 0.0
        %998 = vmatpush.msra.mxu0 0.0
        %999 = vmatpush.msra.mxu0 0.0
        %1000 = vmatpush.msra.mxu0 0.0
        %1001 = vmatpush.msra.mxu0 0.0
        %1002 = vmatpush.msra.mxu0 0.0
        %1003 = vmatpush.msra.mxu0 0.0
        %1004 = vmatpush.msra.mxu0 0.0
        %1005 = vmatpush.msra.mxu0 0.0
        %1006 = vmatpush.msra.mxu0 %v913
        %1007 = vmatmul.f32.gmra.mxu0 %v969
        %v1008 = vpop.f32.mrf.mxu0
        %v1009 = vadd.f32 %v966, %v1008
        %1010 = vdwg.mxu0
        %1011 = vrot.lane.b32.xlu0 %v903, 15
        %v1012 = vpop.permute.xlu0 %1011
        %1013 = vrot.lane.b32.xlu0 %v904, 15
        %v1014 = vpop.permute.xlu0 %1013
        %v1015 = vsel %vm429, %v1012, %v1014
        %v1016 = vsel %vm429, %v1014, %v1012
        %v1017 = vmul.f32 %v1016, %v432
        %v1018 = vmul.f32 %v1015, %v433
        %v1019 = vld [vmem:[%s4 + $0x10] sm:$0xff]
        %v1021 = vsel %vm924, %v1019, 0
        %1023 = vmatpush.msra.mxu0 0.0
        %1024 = vmatpush.msra.mxu0 0.0
        %1025 = vmatpush.msra.mxu0 0.0
        %1026 = vmatpush.msra.mxu0 0.0
        %1027 = vmatpush.msra.mxu0 0.0
        %1028 = vmatpush.msra.mxu0 0.0
        %1029 = vmatpush.msra.mxu0 0.0
        %1030 = vmatpush.msra.mxu0 0.0
        %1031 = vmatpush.msra.mxu0 0.0
        %1032 = vmatpush.msra.mxu0 0.0
        %1033 = vmatpush.msra.mxu0 0.0
        %1034 = vmatpush.msra.mxu0 0.0
        %1035 = vmatpush.msra.mxu0 0.0
        %1036 = vmatpush.msra.mxu0 0.0
        %1037 = vmatpush.msra.mxu0 0.0
        %1038 = vmatpush.msra.mxu0 %v1017
        %1039 = vmatmul.f32.gmra.mxu0 %v1021
        %v1040 = vpop.f32.mrf.mxu0
        %v1041 = vadd.f32 0.0, %v1040
        %1042 = vdwg.mxu0
        %1043 = vmatpush.msra.mxu0 0.0
        %1044 = vmatpush.msra.mxu0 0.0
        %1045 = vmatpush.msra.mxu0 0.0
        %1046 = vmatpush.msra.mxu0 0.0
        %1047 = vmatpush.msra.mxu0 0.0
        %1048 = vmatpush.msra.mxu0 0.0
        %1049 = vmatpush.msra.mxu0 0.0
        %1050 = vmatpush.msra.mxu0 0.0
        %1051 = vmatpush.msra.mxu0 0.0
        %1052 = vmatpush.msra.mxu0 0.0
        %1053 = vmatpush.msra.mxu0 0.0
        %1054 = vmatpush.msra.mxu0 0.0
        %1055 = vmatpush.msra.mxu0 0.0
        %1056 = vmatpush.msra.mxu0 0.0
        %1057 = vmatpush.msra.mxu0 0.0
        %1058 = vmatpush.msra.mxu0 %v1018
        %1059 = vmatmul.f32.gmra.mxu0 %v1021
        %v1060 = vpop.f32.mrf.mxu0
        %v1061 = vadd.f32 0.0, %v1060
        %1062 = vdwg.mxu0
        %v1063 = vadd.f32 %v989, %v1041
        %v1064 = vadd.f32 %v1009, %v1061
        %1065 = vrot.lane.b32.xlu0 %v903, 1
        %v1066 = vpop.permute.xlu0 %1065
        %1067 = vrot.lane.b32.xlu0 %v904, 1
        %v1068 = vpop.permute.xlu0 %1067
        %v1069 = vsel %vm497, %v1066, %v1068
        %v1070 = vsel %vm497, %v1068, %v1066
        %v1071 = vmul.f32 %v1070, %v500
        %v1072 = vmul.f32 %v1069, %v501
        %v1073 = vld [vmem:[%s4 + $0x18] sm:$0xff]
        %v1075 = vsel %vm924, %v1073, 0
        %1077 = vmatpush.msra.mxu0 0.0
        %1078 = vmatpush.msra.mxu0 0.0
        %1079 = vmatpush.msra.mxu0 0.0
        %1080 = vmatpush.msra.mxu0 0.0
        %1081 = vmatpush.msra.mxu0 0.0
        %1082 = vmatpush.msra.mxu0 0.0
        %1083 = vmatpush.msra.mxu0 0.0
        %1084 = vmatpush.msra.mxu0 0.0
        %1085 = vmatpush.msra.mxu0 0.0
        %1086 = vmatpush.msra.mxu0 0.0
        %1087 = vmatpush.msra.mxu0 0.0
        %1088 = vmatpush.msra.mxu0 0.0
        %1089 = vmatpush.msra.mxu0 0.0
        %1090 = vmatpush.msra.mxu0 0.0
        %1091 = vmatpush.msra.mxu0 0.0
        %1092 = vmatpush.msra.mxu0 %v1071
        %1093 = vmatmul.f32.gmra.mxu0 %v1075
        %v1094 = vpop.f32.mrf.mxu0
        %v1095 = vadd.f32 0.0, %v1094
        %1096 = vdwg.mxu0
        %1097 = vmatpush.msra.mxu0 0.0
        %1098 = vmatpush.msra.mxu0 0.0
        %1099 = vmatpush.msra.mxu0 0.0
        %1100 = vmatpush.msra.mxu0 0.0
        %1101 = vmatpush.msra.mxu0 0.0
        %1102 = vmatpush.msra.mxu0 0.0
        %1103 = vmatpush.msra.mxu0 0.0
        %1104 = vmatpush.msra.mxu0 0.0
        %1105 = vmatpush.msra.mxu0 0.0
        %1106 = vmatpush.msra.mxu0 0.0
        %1107 = vmatpush.msra.mxu0 0.0
        %1108 = vmatpush.msra.mxu0 0.0
        %1109 = vmatpush.msra.mxu0 0.0
        %1110 = vmatpush.msra.mxu0 0.0
        %1111 = vmatpush.msra.mxu0 0.0
        %1112 = vmatpush.msra.mxu0 %v1072
        %1113 = vmatmul.f32.gmra.mxu0 %v1075
        %v1114 = vpop.f32.mrf.mxu0
        %v1115 = vadd.f32 0.0, %v1114
        %1116 = vdwg.mxu0
        %v1117 = vadd.f32 %v1063, %v1095
        %v1118 = vadd.f32 %v1064, %v1115
        %v1119 = vmul.f32 %v903, %v556
        %v1120 = vmul.f32 %v904, %v557
        %v1121 = vld [vmem:[%s4 + $0x20] sm:$0xff]
        %v1123 = vsel %vm924, %v1121, 0
        %1125 = vmatpush.msra.mxu0 0.0
        %1126 = vmatpush.msra.mxu0 0.0
        %1127 = vmatpush.msra.mxu0 0.0
        %1128 = vmatpush.msra.mxu0 0.0
        %1129 = vmatpush.msra.mxu0 0.0
        %1130 = vmatpush.msra.mxu0 0.0
        %1131 = vmatpush.msra.mxu0 0.0
        %1132 = vmatpush.msra.mxu0 0.0
        %1133 = vmatpush.msra.mxu0 0.0
        %1134 = vmatpush.msra.mxu0 0.0
        %1135 = vmatpush.msra.mxu0 0.0
        %1136 = vmatpush.msra.mxu0 0.0
        %1137 = vmatpush.msra.mxu0 0.0
        %1138 = vmatpush.msra.mxu0 0.0
        %1139 = vmatpush.msra.mxu0 0.0
        %1140 = vmatpush.msra.mxu0 %v1119
        %1141 = vmatmul.f32.gmra.mxu0 %v1123
        %v1142 = vpop.f32.mrf.mxu0
        %v1143 = vadd.f32 0.0, %v1142
        %1144 = vdwg.mxu0
        %1145 = vmatpush.msra.mxu0 0.0
        %1146 = vmatpush.msra.mxu0 0.0
        %1147 = vmatpush.msra.mxu0 0.0
        %1148 = vmatpush.msra.mxu0 0.0
        %1149 = vmatpush.msra.mxu0 0.0
        %1150 = vmatpush.msra.mxu0 0.0
        %1151 = vmatpush.msra.mxu0 0.0
        %1152 = vmatpush.msra.mxu0 0.0
        %1153 = vmatpush.msra.mxu0 0.0
        %1154 = vmatpush.msra.mxu0 0.0
        %1155 = vmatpush.msra.mxu0 0.0
        %1156 = vmatpush.msra.mxu0 0.0
        %1157 = vmatpush.msra.mxu0 0.0
        %1158 = vmatpush.msra.mxu0 0.0
        %1159 = vmatpush.msra.mxu0 0.0
        %1160 = vmatpush.msra.mxu0 %v1120
        %1161 = vmatmul.f32.gmra.mxu0 %v1123
        %v1162 = vpop.f32.mrf.mxu0
        %v1163 = vadd.f32 0.0, %v1162
        %1164 = vdwg.mxu0
        %v1165 = vadd.f32 %v1117, %v1143
        %v1166 = vadd.f32 %v1118, %v1163
        %1167 = vrot.lane.b32.xlu0 %v903, 127
        %v1168 = vpop.permute.xlu0 %1167
        %1169 = vrot.lane.b32.xlu0 %v904, 127
        %v1170 = vpop.permute.xlu0 %1169
        %v1171 = vsel %vm627, %v1168, %v1170
        %v1172 = vsel %vm627, %v1170, %v1168
        %v1173 = vmul.f32 %v1171, %v630
        %v1174 = vmul.f32 %v1172, %v631
        %v1175 = vld [vmem:[%s4 + $0x28] sm:$0xff]
        %v1177 = vsel %vm924, %v1175, 0
        %1179 = vmatpush.msra.mxu0 0.0
        %1180 = vmatpush.msra.mxu0 0.0
        %1181 = vmatpush.msra.mxu0 0.0
        %1182 = vmatpush.msra.mxu0 0.0
        %1183 = vmatpush.msra.mxu0 0.0
        %1184 = vmatpush.msra.mxu0 0.0
        %1185 = vmatpush.msra.mxu0 0.0
        %1186 = vmatpush.msra.mxu0 0.0
        %1187 = vmatpush.msra.mxu0 0.0
        %1188 = vmatpush.msra.mxu0 0.0
        %1189 = vmatpush.msra.mxu0 0.0
        %1190 = vmatpush.msra.mxu0 0.0
        %1191 = vmatpush.msra.mxu0 0.0
        %1192 = vmatpush.msra.mxu0 0.0
        %1193 = vmatpush.msra.mxu0 0.0
        %1194 = vmatpush.msra.mxu0 %v1173
        %1195 = vmatmul.f32.gmra.mxu0 %v1177
        %v1196 = vpop.f32.mrf.mxu0
        %v1197 = vadd.f32 0.0, %v1196
        %1198 = vdwg.mxu0
        %1199 = vmatpush.msra.mxu0 0.0
        %1200 = vmatpush.msra.mxu0 0.0
        %1201 = vmatpush.msra.mxu0 0.0
        %1202 = vmatpush.msra.mxu0 0.0
        %1203 = vmatpush.msra.mxu0 0.0
        %1204 = vmatpush.msra.mxu0 0.0
        %1205 = vmatpush.msra.mxu0 0.0
        %1206 = vmatpush.msra.mxu0 0.0
        %1207 = vmatpush.msra.mxu0 0.0
        %1208 = vmatpush.msra.mxu0 0.0
        %1209 = vmatpush.msra.mxu0 0.0
        %1210 = vmatpush.msra.mxu0 0.0
        %1211 = vmatpush.msra.mxu0 0.0
        %1212 = vmatpush.msra.mxu0 0.0
        %1213 = vmatpush.msra.mxu0 0.0
        %1214 = vmatpush.msra.mxu0 %v1174
        %1215 = vmatmul.f32.gmra.mxu0 %v1177
        %v1216 = vpop.f32.mrf.mxu0
        %v1217 = vadd.f32 0.0, %v1216
        %1218 = vdwg.mxu0
        %v1219 = vadd.f32 %v1165, %v1197
        %v1220 = vadd.f32 %v1166, %v1217
        %1221 = vrot.lane.b32.xlu0 %v903, 113
        %v1222 = vpop.permute.xlu0 %1221
        %1223 = vrot.lane.b32.xlu0 %v904, 113
        %v1224 = vpop.permute.xlu0 %1223
        %v1225 = vsel %vm695, %v1222, %v1224
        %v1226 = vsel %vm695, %v1224, %v1222
        %v1227 = vmul.f32 %v1225, %v698
        %v1228 = vmul.f32 %v1226, %v699
        %v1229 = vld [vmem:[%s4 + $0x30] sm:$0xff]
        %v1231 = vsel %vm924, %v1229, 0
        %1233 = vmatpush.msra.mxu0 0.0
        %1234 = vmatpush.msra.mxu0 0.0
        %1235 = vmatpush.msra.mxu0 0.0
        %1236 = vmatpush.msra.mxu0 0.0
        %1237 = vmatpush.msra.mxu0 0.0
        %1238 = vmatpush.msra.mxu0 0.0
        %1239 = vmatpush.msra.mxu0 0.0
        %1240 = vmatpush.msra.mxu0 0.0
        %1241 = vmatpush.msra.mxu0 0.0
        %1242 = vmatpush.msra.mxu0 0.0
        %1243 = vmatpush.msra.mxu0 0.0
        %1244 = vmatpush.msra.mxu0 0.0
        %1245 = vmatpush.msra.mxu0 0.0
        %1246 = vmatpush.msra.mxu0 0.0
        %1247 = vmatpush.msra.mxu0 0.0
        %1248 = vmatpush.msra.mxu0 %v1227
        %1249 = vmatmul.f32.gmra.mxu0 %v1231
        %v1250 = vpop.f32.mrf.mxu0
        %v1251 = vadd.f32 0.0, %v1250
        %1252 = vdwg.mxu0
        %1253 = vmatpush.msra.mxu0 0.0
        %1254 = vmatpush.msra.mxu0 0.0
        %1255 = vmatpush.msra.mxu0 0.0
        %1256 = vmatpush.msra.mxu0 0.0
        %1257 = vmatpush.msra.mxu0 0.0
        %1258 = vmatpush.msra.mxu0 0.0
        %1259 = vmatpush.msra.mxu0 0.0
        %1260 = vmatpush.msra.mxu0 0.0
        %1261 = vmatpush.msra.mxu0 0.0
        %1262 = vmatpush.msra.mxu0 0.0
        %1263 = vmatpush.msra.mxu0 0.0
        %1264 = vmatpush.msra.mxu0 0.0
        %1265 = vmatpush.msra.mxu0 0.0
        %1266 = vmatpush.msra.mxu0 0.0
        %1267 = vmatpush.msra.mxu0 0.0
        %1268 = vmatpush.msra.mxu0 %v1228
        %1269 = vmatmul.f32.gmra.mxu0 %v1231
        %v1270 = vpop.f32.mrf.mxu0
        %v1271 = vadd.f32 0.0, %v1270
        %1272 = vdwg.mxu0
        %v1273 = vadd.f32 %v1219, %v1251
        %v1274 = vadd.f32 %v1220, %v1271
        %1275 = vrot.lane.b32.xlu0 %v903, 112
        %v1276 = vpop.permute.xlu0 %1275
        %1277 = vrot.lane.b32.xlu0 %v904, 112
        %v1278 = vpop.permute.xlu0 %1277
        %v1279 = vsel %vm763, %v1276, %v1278
        %v1280 = vsel %vm763, %v1278, %v1276
        %v1281 = vmul.f32 %v1279, %v766
        %v1282 = vmul.f32 %v1280, %v767
        %v1283 = vld [vmem:[%s4 + $0x38] sm:$0xff]
        %v1285 = vsel %vm924, %v1283, 0
        %1287 = vmatpush.msra.mxu0 0.0
        %1288 = vmatpush.msra.mxu0 0.0
        %1289 = vmatpush.msra.mxu0 0.0
        %1290 = vmatpush.msra.mxu0 0.0
        %1291 = vmatpush.msra.mxu0 0.0
        %1292 = vmatpush.msra.mxu0 0.0
        %1293 = vmatpush.msra.mxu0 0.0
        %1294 = vmatpush.msra.mxu0 0.0
        %1295 = vmatpush.msra.mxu0 0.0
        %1296 = vmatpush.msra.mxu0 0.0
        %1297 = vmatpush.msra.mxu0 0.0
        %1298 = vmatpush.msra.mxu0 0.0
        %1299 = vmatpush.msra.mxu0 0.0
        %1300 = vmatpush.msra.mxu0 0.0
        %1301 = vmatpush.msra.mxu0 0.0
        %1302 = vmatpush.msra.mxu0 %v1281
        %1303 = vmatmul.f32.gmra.mxu0 %v1285
        %v1304 = vpop.f32.mrf.mxu0
        %v1305 = vadd.f32 0.0, %v1304
        %1306 = vdwg.mxu0
        %1307 = vmatpush.msra.mxu0 0.0
        %1308 = vmatpush.msra.mxu0 0.0
        %1309 = vmatpush.msra.mxu0 0.0
        %1310 = vmatpush.msra.mxu0 0.0
        %1311 = vmatpush.msra.mxu0 0.0
        %1312 = vmatpush.msra.mxu0 0.0
        %1313 = vmatpush.msra.mxu0 0.0
        %1314 = vmatpush.msra.mxu0 0.0
        %1315 = vmatpush.msra.mxu0 0.0
        %1316 = vmatpush.msra.mxu0 0.0
        %1317 = vmatpush.msra.mxu0 0.0
        %1318 = vmatpush.msra.mxu0 0.0
        %1319 = vmatpush.msra.mxu0 0.0
        %1320 = vmatpush.msra.mxu0 0.0
        %1321 = vmatpush.msra.mxu0 0.0
        %1322 = vmatpush.msra.mxu0 %v1282
        %1323 = vmatmul.f32.gmra.mxu0 %v1285
        %v1324 = vpop.f32.mrf.mxu0
        %v1325 = vadd.f32 0.0, %v1324
        %1326 = vdwg.mxu0
        %v1327 = vadd.f32 %v1273, %v1305
        %v1328 = vadd.f32 %v1274, %v1325
        %1329 = vrot.lane.b32.xlu0 %v903, 111
        %v1330 = vpop.permute.xlu0 %1329
        %1331 = vrot.lane.b32.xlu0 %v904, 111
        %v1332 = vpop.permute.xlu0 %1331
        %v1333 = vsel %vm831, %v1330, %v1332
        %v1334 = vsel %vm831, %v1332, %v1330
        %v1335 = vmul.f32 %v1333, %v834
        %v1336 = vmul.f32 %v1334, %v835
        %v1337 = vld [vmem:[%s4 + $0x40] sm:$0xff]
        %v1339 = vsel %vm924, %v1337, 0
        %1341 = vmatpush.msra.mxu0 0.0
        %1342 = vmatpush.msra.mxu0 0.0
        %1343 = vmatpush.msra.mxu0 0.0
        %1344 = vmatpush.msra.mxu0 0.0
        %1345 = vmatpush.msra.mxu0 0.0
        %1346 = vmatpush.msra.mxu0 0.0
        %1347 = vmatpush.msra.mxu0 0.0
        %1348 = vmatpush.msra.mxu0 0.0
        %1349 = vmatpush.msra.mxu0 0.0
        %1350 = vmatpush.msra.mxu0 0.0
        %1351 = vmatpush.msra.mxu0 0.0
        %1352 = vmatpush.msra.mxu0 0.0
        %1353 = vmatpush.msra.mxu0 0.0
        %1354 = vmatpush.msra.mxu0 0.0
        %1355 = vmatpush.msra.mxu0 0.0
        %1356 = vmatpush.msra.mxu0 %v1335
        %1357 = vmatmul.f32.gmra.mxu0 %v1339
        %v1358 = vpop.f32.mrf.mxu0
        %v1359 = vadd.f32 0.0, %v1358
        %1360 = vdwg.mxu0
        %1361 = vmatpush.msra.mxu0 0.0
        %1362 = vmatpush.msra.mxu0 0.0
        %1363 = vmatpush.msra.mxu0 0.0
        %1364 = vmatpush.msra.mxu0 0.0
        %1365 = vmatpush.msra.mxu0 0.0
        %1366 = vmatpush.msra.mxu0 0.0
        %1367 = vmatpush.msra.mxu0 0.0
        %1368 = vmatpush.msra.mxu0 0.0
        %1369 = vmatpush.msra.mxu0 0.0
        %1370 = vmatpush.msra.mxu0 0.0
        %1371 = vmatpush.msra.mxu0 0.0
        %1372 = vmatpush.msra.mxu0 0.0
        %1373 = vmatpush.msra.mxu0 0.0
        %1374 = vmatpush.msra.mxu0 0.0
        %1375 = vmatpush.msra.mxu0 0.0
        %1376 = vmatpush.msra.mxu0 %v1336
        %1377 = vmatmul.f32.gmra.mxu0 %v1339
        %v1378 = vpop.f32.mrf.mxu0
        %v1379 = vadd.f32 0.0, %v1378
        %1380 = vdwg.mxu0
        %v1381 = vadd.f32 %v1327, %v1359
        %v1382 = vadd.f32 %v1328, %v1379
        %1384 = vset.pattern.permute.xlu0 0
        %1385 = vperm.xlu0 %1384, %v905
        %v1386 = vpop.permute.xlu0 %1385
        %v1388 = vmul.f32 %v1381, %v1386
        %v1389 = vmul.f32 %v1382, %v1386
        %1390 = vset.pattern.permute.xlu0 1
        %1391 = vperm.xlu0 %1390, %v905
        %v1392 = vpop.permute.xlu0 %1391
        %v1394 = vadd.f32 %v1388, %v1392
        %v1395 = vadd.f32 %v1389, %v1392
        %vm1396 = vcmp.gt.f32.partialorder %v1394, 0.0
        %vm1397 = vcmp.gt.f32.partialorder %v1395, 0.0
        %1398 = vset.pattern.permute.xlu0 2
        %1399 = vperm.xlu0 %1398, %v905
        %v1400 = vpop.permute.xlu0 %1399
        %v1402 = vmul.f32 %v1400, %v1394
        %v1403 = vmul.f32 %v1400, %v1395
        %v1404 = vsel %vm1396, %v1394, %v1402
        %v1405 = vsel %vm1397, %v1395, %v1403
        %v1406 = vld [vmem:[%s5 + $0x8] sm:$0xff]
        %1407 = vrot.lane.b32.xlu0 %v1404, 17
        %v1408 = vpop.permute.xlu0 %1407
        %1409 = vrot.lane.b32.xlu0 %v1405, 17
        %v1410 = vpop.permute.xlu0 %1409
        %v1411 = vsel %vm295, %v1408, %v1410
        %v1412 = vsel %vm295, %v1410, %v1408
        %v1413 = vmul.f32 %v1412, %v298
        %v1414 = vmul.f32 %v1411, %v299
        %v1415 = vld [vmem:[%s4 + $0x48] sm:$0xff]
        %1416 = vrot.lane.b32.xlu0 %v1404, 16
        %v1417 = vpop.permute.xlu0 %1416
        %1418 = vrot.lane.b32.xlu0 %v1405, 16
        %v1419 = vpop.permute.xlu0 %1418
        %v1420 = vsel %vm312, %v1417, %v1419
        %v1421 = vsel %vm312, %v1419, %v1417
        %v1422 = vmul.f32 %v1421, %v315
        %v1423 = vmul.f32 %v1420, %v316
        %v1424 = vld [vmem:[%s4 + $0x50] sm:$0xff]
        %v1426 = vsel %vm924, %v1424, 0
        %1428 = vmatpush.msra.mxu0 0.0
        %1429 = vmatpush.msra.mxu0 0.0
        %1430 = vmatpush.msra.mxu0 0.0
        %1431 = vmatpush.msra.mxu0 0.0
        %1432 = vmatpush.msra.mxu0 0.0
        %1433 = vmatpush.msra.mxu0 0.0
        %1434 = vmatpush.msra.mxu0 0.0
        %1435 = vmatpush.msra.mxu0 0.0
        %1436 = vmatpush.msra.mxu0 0.0
        %1437 = vmatpush.msra.mxu0 0.0
        %1438 = vmatpush.msra.mxu0 0.0
        %1439 = vmatpush.msra.mxu0 0.0
        %1440 = vmatpush.msra.mxu0 0.0
        %1441 = vmatpush.msra.mxu0 0.0
        %1442 = vmatpush.msra.mxu0 0.0
        %1443 = vmatpush.msra.mxu0 %v1422
        %1444 = vmatmul.f32.gmra.mxu0 %v1426
        %v1445 = vpop.f32.mrf.mxu0
        %v1446 = vadd.f32 0.0, %v1445
        %1447 = vdwg.mxu0
        %1448 = vmatpush.msra.mxu0 0.0
        %1449 = vmatpush.msra.mxu0 0.0
        %1450 = vmatpush.msra.mxu0 0.0
        %1451 = vmatpush.msra.mxu0 0.0
        %1452 = vmatpush.msra.mxu0 0.0
        %1453 = vmatpush.msra.mxu0 0.0
        %1454 = vmatpush.msra.mxu0 0.0
        %1455 = vmatpush.msra.mxu0 0.0
        %1456 = vmatpush.msra.mxu0 0.0
        %1457 = vmatpush.msra.mxu0 0.0
        %1458 = vmatpush.msra.mxu0 0.0
        %1459 = vmatpush.msra.mxu0 0.0
        %1460 = vmatpush.msra.mxu0 0.0
        %1461 = vmatpush.msra.mxu0 0.0
        %1462 = vmatpush.msra.mxu0 0.0
        %1463 = vmatpush.msra.mxu0 %v1423
        %1464 = vmatmul.f32.gmra.mxu0 %v1426
        %v1465 = vpop.f32.mrf.mxu0
        %v1466 = vadd.f32 0.0, %v1465
        %1467 = vdwg.mxu0
        %v1469 = vsel %vm924, %v1415, 0
        %1471 = vmatpush.msra.mxu0 0.0
        %1472 = vmatpush.msra.mxu0 0.0
        %1473 = vmatpush.msra.mxu0 0.0
        %1474 = vmatpush.msra.mxu0 0.0
        %1475 = vmatpush.msra.mxu0 0.0
        %1476 = vmatpush.msra.mxu0 0.0
        %1477 = vmatpush.msra.mxu0 0.0
        %1478 = vmatpush.msra.mxu0 0.0
        %1479 = vmatpush.msra.mxu0 0.0
        %1480 = vmatpush.msra.mxu0 0.0
        %1481 = vmatpush.msra.mxu0 0.0
        %1482 = vmatpush.msra.mxu0 0.0
        %1483 = vmatpush.msra.mxu0 0.0
        %1484 = vmatpush.msra.mxu0 0.0
        %1485 = vmatpush.msra.mxu0 0.0
        %1486 = vmatpush.msra.mxu0 %v1413
        %1487 = vmatmul.f32.gmra.mxu0 %v1469
        %v1488 = vpop.f32.mrf.mxu0
        %v1489 = vadd.f32 %v1446, %v1488
        %1490 = vdwg.mxu0
        %1491 = vmatpush.msra.mxu0 0.0
        %1492 = vmatpush.msra.mxu0 0.0
        %1493 = vmatpush.msra.mxu0 0.0
        %1494 = vmatpush.msra.mxu0 0.0
        %1495 = vmatpush.msra.mxu0 0.0
        %1496 = vmatpush.msra.mxu0 0.0
        %1497 = vmatpush.msra.mxu0 0.0
        %1498 = vmatpush.msra.mxu0 0.0
        %1499 = vmatpush.msra.mxu0 0.0
        %1500 = vmatpush.msra.mxu0 0.0
        %1501 = vmatpush.msra.mxu0 0.0
        %1502 = vmatpush.msra.mxu0 0.0
        %1503 = vmatpush.msra.mxu0 0.0
        %1504 = vmatpush.msra.mxu0 0.0
        %1505 = vmatpush.msra.mxu0 0.0
        %1506 = vmatpush.msra.mxu0 %v1414
        %1507 = vmatmul.f32.gmra.mxu0 %v1469
        %v1508 = vpop.f32.mrf.mxu0
        %v1509 = vadd.f32 %v1466, %v1508
        %1510 = vdwg.mxu0
        %1511 = vrot.lane.b32.xlu0 %v1404, 15
        %v1512 = vpop.permute.xlu0 %1511
        %1513 = vrot.lane.b32.xlu0 %v1405, 15
        %v1514 = vpop.permute.xlu0 %1513
        %v1515 = vsel %vm429, %v1512, %v1514
        %v1516 = vsel %vm429, %v1514, %v1512
        %v1517 = vmul.f32 %v1516, %v432
        %v1518 = vmul.f32 %v1515, %v433
        %v1519 = vld [vmem:[%s4 + $0x58] sm:$0xff]
        %v1521 = vsel %vm924, %v1519, 0
        %1523 = vmatpush.msra.mxu0 0.0
        %1524 = vmatpush.msra.mxu0 0.0
        %1525 = vmatpush.msra.mxu0 0.0
        %1526 = vmatpush.msra.mxu0 0.0
        %1527 = vmatpush.msra.mxu0 0.0
        %1528 = vmatpush.msra.mxu0 0.0
        %1529 = vmatpush.msra.mxu0 0.0
        %1530 = vmatpush.msra.mxu0 0.0
        %1531 = vmatpush.msra.mxu0 0.0
        %1532 = vmatpush.msra.mxu0 0.0
        %1533 = vmatpush.msra.mxu0 0.0
        %1534 = vmatpush.msra.mxu0 0.0
        %1535 = vmatpush.msra.mxu0 0.0
        %1536 = vmatpush.msra.mxu0 0.0
        %1537 = vmatpush.msra.mxu0 0.0
        %1538 = vmatpush.msra.mxu0 %v1517
        %1539 = vmatmul.f32.gmra.mxu0 %v1521
        %v1540 = vpop.f32.mrf.mxu0
        %v1541 = vadd.f32 0.0, %v1540
        %1542 = vdwg.mxu0
        %1543 = vmatpush.msra.mxu0 0.0
        %1544 = vmatpush.msra.mxu0 0.0
        %1545 = vmatpush.msra.mxu0 0.0
        %1546 = vmatpush.msra.mxu0 0.0
        %1547 = vmatpush.msra.mxu0 0.0
        %1548 = vmatpush.msra.mxu0 0.0
        %1549 = vmatpush.msra.mxu0 0.0
        %1550 = vmatpush.msra.mxu0 0.0
        %1551 = vmatpush.msra.mxu0 0.0
        %1552 = vmatpush.msra.mxu0 0.0
        %1553 = vmatpush.msra.mxu0 0.0
        %1554 = vmatpush.msra.mxu0 0.0
        %1555 = vmatpush.msra.mxu0 0.0
        %1556 = vmatpush.msra.mxu0 0.0
        %1557 = vmatpush.msra.mxu0 0.0
        %1558 = vmatpush.msra.mxu0 %v1518
        %1559 = vmatmul.f32.gmra.mxu0 %v1521
        %v1560 = vpop.f32.mrf.mxu0
        %v1561 = vadd.f32 0.0, %v1560
        %1562 = vdwg.mxu0
        %v1563 = vadd.f32 %v1489, %v1541
        %v1564 = vadd.f32 %v1509, %v1561
        %1565 = vrot.lane.b32.xlu0 %v1404, 1
        %v1566 = vpop.permute.xlu0 %1565
        %1567 = vrot.lane.b32.xlu0 %v1405, 1
        %v1568 = vpop.permute.xlu0 %1567
        %v1569 = vsel %vm497, %v1566, %v1568
        %v1570 = vsel %vm497, %v1568, %v1566
        %v1571 = vmul.f32 %v1570, %v500
        %v1572 = vmul.f32 %v1569, %v501
        %v1573 = vld [vmem:[%s4 + $0x60] sm:$0xff]
        %v1575 = vsel %vm924, %v1573, 0
        %1577 = vmatpush.msra.mxu0 0.0
        %1578 = vmatpush.msra.mxu0 0.0
        %1579 = vmatpush.msra.mxu0 0.0
        %1580 = vmatpush.msra.mxu0 0.0
        %1581 = vmatpush.msra.mxu0 0.0
        %1582 = vmatpush.msra.mxu0 0.0
        %1583 = vmatpush.msra.mxu0 0.0
        %1584 = vmatpush.msra.mxu0 0.0
        %1585 = vmatpush.msra.mxu0 0.0
        %1586 = vmatpush.msra.mxu0 0.0
        %1587 = vmatpush.msra.mxu0 0.0
        %1588 = vmatpush.msra.mxu0 0.0
        %1589 = vmatpush.msra.mxu0 0.0
        %1590 = vmatpush.msra.mxu0 0.0
        %1591 = vmatpush.msra.mxu0 0.0
        %1592 = vmatpush.msra.mxu0 %v1571
        %1593 = vmatmul.f32.gmra.mxu0 %v1575
        %v1594 = vpop.f32.mrf.mxu0
        %v1595 = vadd.f32 0.0, %v1594
        %1596 = vdwg.mxu0
        %1597 = vmatpush.msra.mxu0 0.0
        %1598 = vmatpush.msra.mxu0 0.0
        %1599 = vmatpush.msra.mxu0 0.0
        %1600 = vmatpush.msra.mxu0 0.0
        %1601 = vmatpush.msra.mxu0 0.0
        %1602 = vmatpush.msra.mxu0 0.0
        %1603 = vmatpush.msra.mxu0 0.0
        %1604 = vmatpush.msra.mxu0 0.0
        %1605 = vmatpush.msra.mxu0 0.0
        %1606 = vmatpush.msra.mxu0 0.0
        %1607 = vmatpush.msra.mxu0 0.0
        %1608 = vmatpush.msra.mxu0 0.0
        %1609 = vmatpush.msra.mxu0 0.0
        %1610 = vmatpush.msra.mxu0 0.0
        %1611 = vmatpush.msra.mxu0 0.0
        %1612 = vmatpush.msra.mxu0 %v1572
        %1613 = vmatmul.f32.gmra.mxu0 %v1575
        %v1614 = vpop.f32.mrf.mxu0
        %v1615 = vadd.f32 0.0, %v1614
        %1616 = vdwg.mxu0
        %v1617 = vadd.f32 %v1563, %v1595
        %v1618 = vadd.f32 %v1564, %v1615
        %v1619 = vmul.f32 %v1404, %v556
        %v1620 = vmul.f32 %v1405, %v557
        %v1621 = vld [vmem:[%s4 + $0x68] sm:$0xff]
        %v1623 = vsel %vm924, %v1621, 0
        %1625 = vmatpush.msra.mxu0 0.0
        %1626 = vmatpush.msra.mxu0 0.0
        %1627 = vmatpush.msra.mxu0 0.0
        %1628 = vmatpush.msra.mxu0 0.0
        %1629 = vmatpush.msra.mxu0 0.0
        %1630 = vmatpush.msra.mxu0 0.0
        %1631 = vmatpush.msra.mxu0 0.0
        %1632 = vmatpush.msra.mxu0 0.0
        %1633 = vmatpush.msra.mxu0 0.0
        %1634 = vmatpush.msra.mxu0 0.0
        %1635 = vmatpush.msra.mxu0 0.0
        %1636 = vmatpush.msra.mxu0 0.0
        %1637 = vmatpush.msra.mxu0 0.0
        %1638 = vmatpush.msra.mxu0 0.0
        %1639 = vmatpush.msra.mxu0 0.0
        %1640 = vmatpush.msra.mxu0 %v1619
        %1641 = vmatmul.f32.gmra.mxu0 %v1623
        %v1642 = vpop.f32.mrf.mxu0
        %v1643 = vadd.f32 0.0, %v1642
        %1644 = vdwg.mxu0
        %1645 = vmatpush.msra.mxu0 0.0
        %1646 = vmatpush.msra.mxu0 0.0
        %1647 = vmatpush.msra.mxu0 0.0
        %1648 = vmatpush.msra.mxu0 0.0
        %1649 = vmatpush.msra.mxu0 0.0
        %1650 = vmatpush.msra.mxu0 0.0
        %1651 = vmatpush.msra.mxu0 0.0
        %1652 = vmatpush.msra.mxu0 0.0
        %1653 = vmatpush.msra.mxu0 0.0
        %1654 = vmatpush.msra.mxu0 0.0
        %1655 = vmatpush.msra.mxu0 0.0
        %1656 = vmatpush.msra.mxu0 0.0
        %1657 = vmatpush.msra.mxu0 0.0
        %1658 = vmatpush.msra.mxu0 0.0
        %1659 = vmatpush.msra.mxu0 0.0
        %1660 = vmatpush.msra.mxu0 %v1620
        %1661 = vmatmul.f32.gmra.mxu0 %v1623
        %v1662 = vpop.f32.mrf.mxu0
        %v1663 = vadd.f32 0.0, %v1662
        %1664 = vdwg.mxu0
        %v1665 = vadd.f32 %v1617, %v1643
        %v1666 = vadd.f32 %v1618, %v1663
        %1667 = vrot.lane.b32.xlu0 %v1404, 127
        %v1668 = vpop.permute.xlu0 %1667
        %1669 = vrot.lane.b32.xlu0 %v1405, 127
        %v1670 = vpop.permute.xlu0 %1669
        %v1671 = vsel %vm627, %v1668, %v1670
        %v1672 = vsel %vm627, %v1670, %v1668
        %v1673 = vmul.f32 %v1671, %v630
        %v1674 = vmul.f32 %v1672, %v631
        %v1675 = vld [vmem:[%s4 + $0x70] sm:$0xff]
        %v1677 = vsel %vm924, %v1675, 0
        %1679 = vmatpush.msra.mxu0 0.0
        %1680 = vmatpush.msra.mxu0 0.0
        %1681 = vmatpush.msra.mxu0 0.0
        %1682 = vmatpush.msra.mxu0 0.0
        %1683 = vmatpush.msra.mxu0 0.0
        %1684 = vmatpush.msra.mxu0 0.0
        %1685 = vmatpush.msra.mxu0 0.0
        %1686 = vmatpush.msra.mxu0 0.0
        %1687 = vmatpush.msra.mxu0 0.0
        %1688 = vmatpush.msra.mxu0 0.0
        %1689 = vmatpush.msra.mxu0 0.0
        %1690 = vmatpush.msra.mxu0 0.0
        %1691 = vmatpush.msra.mxu0 0.0
        %1692 = vmatpush.msra.mxu0 0.0
        %1693 = vmatpush.msra.mxu0 0.0
        %1694 = vmatpush.msra.mxu0 %v1673
        %1695 = vmatmul.f32.gmra.mxu0 %v1677
        %v1696 = vpop.f32.mrf.mxu0
        %v1697 = vadd.f32 0.0, %v1696
        %1698 = vdwg.mxu0
        %1699 = vmatpush.msra.mxu0 0.0
        %1700 = vmatpush.msra.mxu0 0.0
        %1701 = vmatpush.msra.mxu0 0.0
        %1702 = vmatpush.msra.mxu0 0.0
        %1703 = vmatpush.msra.mxu0 0.0
        %1704 = vmatpush.msra.mxu0 0.0
        %1705 = vmatpush.msra.mxu0 0.0
        %1706 = vmatpush.msra.mxu0 0.0
        %1707 = vmatpush.msra.mxu0 0.0
        %1708 = vmatpush.msra.mxu0 0.0
        %1709 = vmatpush.msra.mxu0 0.0
        %1710 = vmatpush.msra.mxu0 0.0
        %1711 = vmatpush.msra.mxu0 0.0
        %1712 = vmatpush.msra.mxu0 0.0
        %1713 = vmatpush.msra.mxu0 0.0
        %1714 = vmatpush.msra.mxu0 %v1674
        %1715 = vmatmul.f32.gmra.mxu0 %v1677
        %v1716 = vpop.f32.mrf.mxu0
        %v1717 = vadd.f32 0.0, %v1716
        %1718 = vdwg.mxu0
        %v1719 = vadd.f32 %v1665, %v1697
        %v1720 = vadd.f32 %v1666, %v1717
        %1721 = vrot.lane.b32.xlu0 %v1404, 113
        %v1722 = vpop.permute.xlu0 %1721
        %1723 = vrot.lane.b32.xlu0 %v1405, 113
        %v1724 = vpop.permute.xlu0 %1723
        %v1725 = vsel %vm695, %v1722, %v1724
        %v1726 = vsel %vm695, %v1724, %v1722
        %v1727 = vmul.f32 %v1725, %v698
        %v1728 = vmul.f32 %v1726, %v699
        %v1729 = vld [vmem:[%s4 + $0x78] sm:$0xff]
        %v1731 = vsel %vm924, %v1729, 0
        %1733 = vmatpush.msra.mxu0 0.0
        %1734 = vmatpush.msra.mxu0 0.0
        %1735 = vmatpush.msra.mxu0 0.0
        %1736 = vmatpush.msra.mxu0 0.0
        %1737 = vmatpush.msra.mxu0 0.0
        %1738 = vmatpush.msra.mxu0 0.0
        %1739 = vmatpush.msra.mxu0 0.0
        %1740 = vmatpush.msra.mxu0 0.0
        %1741 = vmatpush.msra.mxu0 0.0
        %1742 = vmatpush.msra.mxu0 0.0
        %1743 = vmatpush.msra.mxu0 0.0
        %1744 = vmatpush.msra.mxu0 0.0
        %1745 = vmatpush.msra.mxu0 0.0
        %1746 = vmatpush.msra.mxu0 0.0
        %1747 = vmatpush.msra.mxu0 0.0
        %1748 = vmatpush.msra.mxu0 %v1727
        %1749 = vmatmul.f32.gmra.mxu0 %v1731
        %v1750 = vpop.f32.mrf.mxu0
        %v1751 = vadd.f32 0.0, %v1750
        %1752 = vdwg.mxu0
        %1753 = vmatpush.msra.mxu0 0.0
        %1754 = vmatpush.msra.mxu0 0.0
        %1755 = vmatpush.msra.mxu0 0.0
        %1756 = vmatpush.msra.mxu0 0.0
        %1757 = vmatpush.msra.mxu0 0.0
        %1758 = vmatpush.msra.mxu0 0.0
        %1759 = vmatpush.msra.mxu0 0.0
        %1760 = vmatpush.msra.mxu0 0.0
        %1761 = vmatpush.msra.mxu0 0.0
        %1762 = vmatpush.msra.mxu0 0.0
        %1763 = vmatpush.msra.mxu0 0.0
        %1764 = vmatpush.msra.mxu0 0.0
        %1765 = vmatpush.msra.mxu0 0.0
        %1766 = vmatpush.msra.mxu0 0.0
        %1767 = vmatpush.msra.mxu0 0.0
        %1768 = vmatpush.msra.mxu0 %v1728
        %1769 = vmatmul.f32.gmra.mxu0 %v1731
        %v1770 = vpop.f32.mrf.mxu0
        %v1771 = vadd.f32 0.0, %v1770
        %1772 = vdwg.mxu0
        %v1773 = vadd.f32 %v1719, %v1751
        %v1774 = vadd.f32 %v1720, %v1771
        %1775 = vrot.lane.b32.xlu0 %v1404, 112
        %v1776 = vpop.permute.xlu0 %1775
        %1777 = vrot.lane.b32.xlu0 %v1405, 112
        %v1778 = vpop.permute.xlu0 %1777
        %v1779 = vsel %vm763, %v1776, %v1778
        %v1780 = vsel %vm763, %v1778, %v1776
        %v1781 = vmul.f32 %v1779, %v766
        %v1782 = vmul.f32 %v1780, %v767
        %v1783 = vld [vmem:[%s4 + $0x80] sm:$0xff]
        %v1785 = vsel %vm924, %v1783, 0
        %1787 = vmatpush.msra.mxu0 0.0
        %1788 = vmatpush.msra.mxu0 0.0
        %1789 = vmatpush.msra.mxu0 0.0
        %1790 = vmatpush.msra.mxu0 0.0
        %1791 = vmatpush.msra.mxu0 0.0
        %1792 = vmatpush.msra.mxu0 0.0
        %1793 = vmatpush.msra.mxu0 0.0
        %1794 = vmatpush.msra.mxu0 0.0
        %1795 = vmatpush.msra.mxu0 0.0
        %1796 = vmatpush.msra.mxu0 0.0
        %1797 = vmatpush.msra.mxu0 0.0
        %1798 = vmatpush.msra.mxu0 0.0
        %1799 = vmatpush.msra.mxu0 0.0
        %1800 = vmatpush.msra.mxu0 0.0
        %1801 = vmatpush.msra.mxu0 0.0
        %1802 = vmatpush.msra.mxu0 %v1781
        %1803 = vmatmul.f32.gmra.mxu0 %v1785
        %v1804 = vpop.f32.mrf.mxu0
        %v1805 = vadd.f32 0.0, %v1804
        %1806 = vdwg.mxu0
        %1807 = vmatpush.msra.mxu0 0.0
        %1808 = vmatpush.msra.mxu0 0.0
        %1809 = vmatpush.msra.mxu0 0.0
        %1810 = vmatpush.msra.mxu0 0.0
        %1811 = vmatpush.msra.mxu0 0.0
        %1812 = vmatpush.msra.mxu0 0.0
        %1813 = vmatpush.msra.mxu0 0.0
        %1814 = vmatpush.msra.mxu0 0.0
        %1815 = vmatpush.msra.mxu0 0.0
        %1816 = vmatpush.msra.mxu0 0.0
        %1817 = vmatpush.msra.mxu0 0.0
        %1818 = vmatpush.msra.mxu0 0.0
        %1819 = vmatpush.msra.mxu0 0.0
        %1820 = vmatpush.msra.mxu0 0.0
        %1821 = vmatpush.msra.mxu0 0.0
        %1822 = vmatpush.msra.mxu0 %v1782
        %1823 = vmatmul.f32.gmra.mxu0 %v1785
        %v1824 = vpop.f32.mrf.mxu0
        %v1825 = vadd.f32 0.0, %v1824
        %1826 = vdwg.mxu0
        %v1827 = vadd.f32 %v1773, %v1805
        %v1828 = vadd.f32 %v1774, %v1825
        %1829 = vrot.lane.b32.xlu0 %v1404, 111
        %v1830 = vpop.permute.xlu0 %1829
        %1831 = vrot.lane.b32.xlu0 %v1405, 111
        %v1832 = vpop.permute.xlu0 %1831
        %v1833 = vsel %vm831, %v1830, %v1832
        %v1834 = vsel %vm831, %v1832, %v1830
        %v1835 = vmul.f32 %v1833, %v834
        %v1836 = vmul.f32 %v1834, %v835
        %v1837 = vld [vmem:[%s4 + $0x88] sm:$0xff]
        %v1839 = vsel %vm924, %v1837, 0
        %1841 = vmatpush.msra.mxu0 0.0
        %1842 = vmatpush.msra.mxu0 0.0
        %1843 = vmatpush.msra.mxu0 0.0
        %1844 = vmatpush.msra.mxu0 0.0
        %1845 = vmatpush.msra.mxu0 0.0
        %1846 = vmatpush.msra.mxu0 0.0
        %1847 = vmatpush.msra.mxu0 0.0
        %1848 = vmatpush.msra.mxu0 0.0
        %1849 = vmatpush.msra.mxu0 0.0
        %1850 = vmatpush.msra.mxu0 0.0
        %1851 = vmatpush.msra.mxu0 0.0
        %1852 = vmatpush.msra.mxu0 0.0
        %1853 = vmatpush.msra.mxu0 0.0
        %1854 = vmatpush.msra.mxu0 0.0
        %1855 = vmatpush.msra.mxu0 0.0
        %1856 = vmatpush.msra.mxu0 %v1835
        %1857 = vmatmul.f32.gmra.mxu0 %v1839
        %v1858 = vpop.f32.mrf.mxu0
        %v1859 = vadd.f32 0.0, %v1858
        %1860 = vdwg.mxu0
        %1861 = vmatpush.msra.mxu0 0.0
        %1862 = vmatpush.msra.mxu0 0.0
        %1863 = vmatpush.msra.mxu0 0.0
        %1864 = vmatpush.msra.mxu0 0.0
        %1865 = vmatpush.msra.mxu0 0.0
        %1866 = vmatpush.msra.mxu0 0.0
        %1867 = vmatpush.msra.mxu0 0.0
        %1868 = vmatpush.msra.mxu0 0.0
        %1869 = vmatpush.msra.mxu0 0.0
        %1870 = vmatpush.msra.mxu0 0.0
        %1871 = vmatpush.msra.mxu0 0.0
        %1872 = vmatpush.msra.mxu0 0.0
        %1873 = vmatpush.msra.mxu0 0.0
        %1874 = vmatpush.msra.mxu0 0.0
        %1875 = vmatpush.msra.mxu0 0.0
        %1876 = vmatpush.msra.mxu0 %v1836
        %1877 = vmatmul.f32.gmra.mxu0 %v1839
        %v1878 = vpop.f32.mrf.mxu0
        %v1879 = vadd.f32 0.0, %v1878
        %1880 = vdwg.mxu0
        %v1881 = vadd.f32 %v1827, %v1859
        %v1882 = vadd.f32 %v1828, %v1879
        %1884 = vset.pattern.permute.xlu0 0
        %1885 = vperm.xlu0 %1884, %v1406
        %v1886 = vpop.permute.xlu0 %1885
        %v1888 = vmul.f32 %v1881, %v1886
        %v1889 = vmul.f32 %v1882, %v1886
        %1890 = vset.pattern.permute.xlu0 1
        %1891 = vperm.xlu0 %1890, %v1406
        %v1892 = vpop.permute.xlu0 %1891
        %v1894 = vadd.f32 %v1888, %v1892
        %v1895 = vadd.f32 %v1889, %v1892
        %vm1896 = vcmp.gt.f32.partialorder %v1894, 0.0
        %vm1897 = vcmp.gt.f32.partialorder %v1895, 0.0
        %1898 = vset.pattern.permute.xlu0 2
        %1899 = vperm.xlu0 %1898, %v1406
        %v1900 = vpop.permute.xlu0 %1899
        %v1902 = vmul.f32 %v1900, %v1894
        %v1903 = vmul.f32 %v1900, %v1895
        %v1904 = vsel %vm1896, %v1894, %v1902
        %v1905 = vsel %vm1897, %v1895, %v1903
        %v1906 = vadd.f32 %v1904, %v903
        %v1907 = vadd.f32 %v1905, %v904
        %v1908 = vld [vmem:[%s6] sm:$0xff]
        %vm1909 = vcmp.gt.f32.partialorder %v1906, 0.0
        %vm1910 = vcmp.gt.f32.partialorder %v1907, 0.0
        %1912 = vset.pattern.permute.xlu0 0
        %1913 = vperm.xlu0 %1912, %v1908
        %v1914 = vpop.permute.xlu0 %1913
        %v1916 = vmul.f32 %v1914, %v1906
        %v1917 = vmul.f32 %v1914, %v1907
        %v1918 = vsel %vm1909, %v1906, %v1916
        %v1919 = vsel %vm1910, %v1907, %v1917
        %1920 = vst [vmem:[%s271] sm:$0xff] %v1918
        %1921 = vst [vmem:[%s271 + $0x8] sm:$0xff] %v1919
        %s1922 = sand.u32 %s181, 1
        %s1923 = scalar_lea.sflag [#allocation3], %s1922
        %s1924 = sand.u32 %s181, 1
        %s1925 = smul.addr %s1924, 16
        %s1926 = scalar_lea.vmem [#allocation2], %s1925
        // Predicated region
        $region49: #{tpu_custom_call.1} parent=47 // pred_check
          %p1927 = pneg %p191
        $region50: #{tpu_custom_call.1} parent=47 // pred_check_branch
          %1929 = sbr.rel (%p1927) target = $region52
        $region51: #{tpu_custom_call.1} parent=47 // pred_region
          %1931 = vsyncadd %s1923, 0
          %s1932 = smul.addr %s21, 2
          %s1933 = smul.addr %s1932, 8
          %s1934 = scalar_lea.hbm %s7, %s1933
          %s1936 = sshll.u32 %s1926, 4
          %s1937 = int_to_ptr.vmem [resolvable:$true] %s1936
          %s1938 = sshll.u32 %s1934, 4
          %s1939 = int_to_ptr.hbm [resolvable:$true] %s1938
          %1941 = dma.vmem_to_hbm [thread:$0]  %s1937, 256, %s1939, %s1923
        $region52: #{tpu_custom_call.1} parent=47 // pred_fallthru
          _
      $region48: #{tpu_custom_call.1} parent=5 // pred_fallthru
        _
      %p1942 = scmp.le.s32.totalorder 2, %s16
      // Predicated region
      $region53: #{tpu_custom_call.1} parent=5 // pred_check
        %p1943 = pneg %p1942
      $region54: #{tpu_custom_call.1} parent=5 // pred_check_branch
        %1945 = sbr.rel (%p1943) target = $region56
      $region55: #{tpu_custom_call.1} parent=5 // pred_region
        %s1946 = ssub.s32 %s16, 2
        // Predicated region
        $region57: #{tpu_custom_call.1} parent=55 // pred_check
          %p1947 = pneg %p197
        $region58: #{tpu_custom_call.1} parent=55 // pred_check_branch
          %1949 = sbr.rel (%p1947) target = $region60
        $region59: #{tpu_custom_call.1} parent=55 // pred_region
          %s1950 = sand.u32 %s182, 1
          %s1951 = scalar_lea.sflag [#allocation3], %s1950
          %s1952 = sand.u32 %s182, 1
          %s1953 = smul.addr %s1952, 16
          %s1954 = scalar_lea.vmem [#allocation2], %s1953
          %1956 = dma.done %s1951, 256
        $region60: #{tpu_custom_call.1} parent=55 // pred_fallthru
          _
      $region56: #{tpu_custom_call.1} parent=5 // pred_fallthru
        _
    $region6: #{tpu_custom_call.1} parent=1 // loop_footer
      %s20 = sadd.s32 1, %s16
    $region7: #{tpu_custom_call.1} parent=1 // loop_footer_branch
      %15 = sbr.rel target = $region3
    $region8: #{tpu_custom_call.1} parent=1 // loop_exit
      _
    %1957 = vsyncpa [#allocation3], 1
    %s1958 = scalar_lea.sflag [#allocation3], 1
    %1959 = vsyncpa %s1958, 1

</llo_original>
